<compile_context>
chip_gen: v7x
topology: tpu7x:2x2x1
jax: 0.10.0
libtpu: 0.0.40
codegen_flags: <defaults>
</compile_context>

<pallas_src>
import jax
import jax.numpy as jnp
from jax.experimental import pallas as pl
from jax.experimental.pallas import tpu as pltpu


# ----------------------------------------------------------------------------
# Kernels
# ----------------------------------------------------------------------------
def _make_conv_bn_relu_kernel(T, F, Cin, Cout, pool):
    """Fused 3x3 conv (pad=1) + BatchNorm(eval) + ReLU [+ MaxPool2d((1,2))].

    One grid step handles one batch element.

    x_ref:     (1, T, F, Cin)    NHWC input block (VMEM)
    w_ref:     (9*Cin, Cout)     conv weights, row = (dt*3+df)*Cin + ci (VMEM)
    scale_ref: (1, Cout)         gamma / sqrt(var + eps)
    shift_ref: (1, Cout)         beta + (bias - mean) * scale
    o_ref:     (1, T, F_out, Cout)  with F_out = F//2 if pool else F
    xpad_ref:  (T+2, F+2, Cin)   VMEM scratch holding the zero halo
    """

    def kernel(x_ref, w_ref, scale_ref, shift_ref, o_ref, xpad_ref):
        # Zero-padded halo in VMEM scratch (border stays 0, interior rewritten
        # every grid step).  No wrapper-side jnp.pad HBM pass.
        xpad_ref[...] = jnp.zeros_like(xpad_ref)
        xpad_ref[1:T + 1, 1:F + 1, :] = x_ref[0]

        w = w_ref[...]                                    # (9*Cin, Cout)
        acc = jnp.zeros((T * F, Cout), jnp.float32)
        # 3x3 conv as 9 shifted (T*F, Cin) @ (Cin, Cout) MXU matmuls.
        for dt in range(3):
            for df in range(3):
                patch = xpad_ref[dt:dt + T, df:df + F, :].reshape(T * F, Cin)
                tap = dt * 3 + df
                acc = acc + jnp.dot(
                    patch, w[tap * Cin:(tap + 1) * Cin, :],
                    preferred_element_type=jnp.float32)

        # Fused BatchNorm(eval) + ReLU (per-output-channel affine).
        y = jnp.maximum(acc * scale_ref[...] + shift_ref[...], 0.0)

        if pool:
            # Fused MaxPool2d((1, 2)) over F: adjacent F rows of the flattened
            # (T*F, Cout) result become adjacent Cout-wide lane groups, then a
            # single lane-group max.  (No strided sublane reads.)
            y = y.reshape(T * F // 2, 2 * Cout)
            y = jnp.maximum(y[:, :Cout], y[:, Cout:])
            o_ref[0] = y.reshape(T, F // 2, Cout)
        else:
            o_ref[0] = y.reshape(T, F, Cout)

    return kernel


def _linear_kernel(x_ref, w_ref, b_ref, o_ref):
    """out = x @ w + b for one M-tile (MXU matmul)."""
    o_ref[...] = (
        jnp.dot(x_ref[...], w_ref[...], preferred_element_type=jnp.float32)
        + b_ref[...]
    ).astype(o_ref.dtype)


# ----------------------------------------------------------------------------
# Wrappers (pallas_call plumbing)
# ----------------------------------------------------------------------------
def conv_bn_relu(x, w_oihw, bias, gamma, beta, mean, var, *, pool, eps=1e-5):
    """x: (B, T, F, Cin) NHWC; w_oihw: (Cout, Cin, kT, kF) torch layout."""
    B, T, F, Cin = x.shape
    Cout = w_oihw.shape[0]
    if pool:
        assert F % 2 == 0, "MaxPool2d((1,2)) needs even F"
    Fo = F // 2 if pool else F

    scale = (gamma / jnp.sqrt(var + eps)).astype(jnp.float32)
    shift = (beta + (bias - mean) * scale).astype(jnp.float32)
    # (Cout, Cin, kT, kF) -> (kT, kF, Cin, Cout) -> (9*Cin, Cout)
    w_mat = jnp.transpose(w_oihw, (2, 3, 1, 0)).reshape(9 * Cin, Cout)
    w_mat = w_mat.astype(jnp.float32)

    kernel = _make_conv_bn_relu_kernel(T, F, Cin, Cout, pool)
    return pl.pallas_call(
        kernel,
        out_shape=jax.ShapeDtypeStruct((B, T, Fo, Cout), jnp.float32),
        grid=(B,),
        in_specs=[
            pl.BlockSpec((1, T, F, Cin), lambda b: (b, 0, 0, 0)),
            pl.BlockSpec((9 * Cin, Cout), lambda b: (0, 0)),
            pl.BlockSpec((1, Cout), lambda b: (0, 0)),
            pl.BlockSpec((1, Cout), lambda b: (0, 0)),
        ],
        out_specs=pl.BlockSpec((1, T, Fo, Cout), lambda b: (b, 0, 0, 0)),
        scratch_shapes=[pltpu.VMEM((T + 2, F + 2, Cin), jnp.float32)],
        compiler_params=pltpu.CompilerParams(
            dimension_semantics=("parallel",)),
    )(x, w_mat, scale.reshape(1, Cout), shift.reshape(1, Cout))


def linear(x, w_kn, bias):
    """x: (M, K), w_kn: (K, N), bias: (N,) -> (M, N), tiled over M."""
    M, K = x.shape
    N = w_kn.shape[1]
    if M % 128 == 0:
        tm = 128
    elif M % 8 == 0:
        tm = 8
    else:
        tm = M
    return pl.pallas_call(
        _linear_kernel,
        out_shape=jax.ShapeDtypeStruct((M, N), jnp.float32),
        grid=(M // tm,),
        in_specs=[
            pl.BlockSpec((tm, K), lambda i: (i, 0)),
            pl.BlockSpec((K, N), lambda i: (0, 0)),
            pl.BlockSpec((1, N), lambda i: (0, 0)),
        ],
        out_specs=pl.BlockSpec((tm, N), lambda i: (i, 0)),
        compiler_params=pltpu.CompilerParams(
            dimension_semantics=("parallel",)),
    )(x, w_kn, bias.reshape(1, N))


# ----------------------------------------------------------------------------
# Full forward pass (Pallas kernels + thin JAX glue)
# ----------------------------------------------------------------------------
def base_conv_model_forward(mel, p):
    """mel: (B, T, F)  ->  (B, T, output_features)."""
    B, T, F = mel.shape
    assert F % 4 == 0, "input_features must be divisible by 4 (two F/2 pools)"

    x = mel.astype(jnp.float32)[..., None]               # (B, T, F, 1) NHWC
    x = conv_bn_relu(x, p["w1"], p["b1"], p["g1"], p["bt1"], p["m1"], p["v1"],
                     pool=False)
    # conv2 + BN + ReLU + MaxPool((1,2)); Dropout(0.25) -> identity (eval)
    x = conv_bn_relu(x, p["w2"], p["b2"], p["g2"], p["bt2"], p["m2"], p["v2"],
                     pool=True)
    # conv3 + BN + ReLU + MaxPool((1,2)); Dropout(0.25) -> identity (eval)
    x = conv_bn_relu(x, p["w3"], p["b3"], p["g3"], p["bt3"], p["m3"], p["v3"],
                     pool=True)

    # x: (B, T, F//4, C2).  PyTorch flattens as (C2, F//4); fold that
    # permutation into the linear weight instead of transposing activations.
    _, _, F4, C2 = x.shape
    N = p["wf"].shape[0]
    w_lin = jnp.transpose(p["wf"].reshape(N, C2, F4), (2, 1, 0))
    w_lin = w_lin.reshape(F4 * C2, N).astype(jnp.float32)

    y = linear(x.reshape(B * T, F4 * C2), w_lin, p["bf"])  # Dropout(0.5) -> id
    return y.reshape(B, T, N)


# ----------------------------------------------------------------------------
# Pure-JAX reference (PyTorch semantics) for verification
# ----------------------------------------------------------------------------
def reference_forward(mel, p, eps=1e-5):
    B, T, F = mel.shape
    x = mel[:, :, :, None].astype(jnp.float32)  # NHWC: (B, T, F, 1)

    def cbr(x, w, b, g, bt, m, v):
        w_hwio = jnp.transpose(w, (2, 3, 1, 0))  # (kT, kF, Cin, Cout)
        y = jax.lax.conv_general_dilated(
            x, w_hwio, (1, 1), "SAME",
            dimension_numbers=("NHWC", "HWIO", "NHWC")) + b
        y = (y - m) / jnp.sqrt(v + eps) * g + bt
        return jnp.maximum(y, 0.0)

    x = cbr(x, p["w1"], p["b1"], p["g1"], p["bt1"], p["m1"], p["v1"])
    x = cbr(x, p["w2"], p["b2"], p["g2"], p["bt2"], p["m2"], p["v2"])
    x = jnp.maximum(x[:, :, 0::2, :], x[:, :, 1::2, :])
    x = cbr(x, p["w3"], p["b3"], p["g3"], p["bt3"], p["m3"], p["v3"])
    x = jnp.maximum(x[:, :, 0::2, :], x[:, :, 1::2, :])
    x = jnp.transpose(x, (0, 1, 3, 2)).reshape(B, T, -1)
    return x @ p["wf"].T + p["bf"]


# ----------------------------------------------------------------------------
# Deterministic parameter construction (torch layouts)
# ----------------------------------------------------------------------------
def make_params(input_features, output_features, key):
    assert output_features % 16 == 0
    C1 = output_features // 16
    C2 = output_features // 8
    ks = iter(jax.random.split(key, 32))

    def nrm(shape, s=0.1):
        return s * jax.random.normal(next(ks), shape, jnp.float32)

    def bn(c):
        return dict(g=1.0 + nrm((c,)), bt=nrm((c,)), m=nrm((c,)),
                    v=0.5 + jnp.abs(nrm((c,))))

    p = {}
    for name, (cout, cin) in (("1", (C1, 1)), ("2", (C1, C1)), ("3", (C2, C1))):
        p["w" + name] = nrm((cout, cin, 3, 3))
        p["b" + name] = nrm((cout,))
        b = bn(cout)
        p["g" + name], p["bt" + name] = b["g"], b["bt"]
        p["m" + name], p["v" + name] = b["m"], b["v"]
    d_in = C2 * (input_features // 4)
    p["wf"] = nrm((output_features, d_in))  # torch Linear layout (out, in)
    p["bf"] = nrm((output_features,))
    return p


if __name__ == "__main__":
    B, T = 2, 8
    input_features, output_features = 16, 32

    params = make_params(input_features, output_features, jax.random.PRNGKey(1))
    mel = jax.random.normal(jax.random.PRNGKey(0), (B, T, input_features),
                            jnp.float32)

    out = jax.block_until_ready(base_conv_model_forward(mel, params))
    ref = jax.block_until_ready(reference_forward(mel, params))

    assert out.shape == (B, T, output_features), out.shape
    max_err = float(jnp.max(jnp.abs(out - ref)))
    assert max_err < 1e-3, f"mismatch vs reference: {max_err}"
    print("KERNEL_OK")
</pallas_src>

<mosaic_0001>
module attributes {stable_mosaic.version = 11 : i64} {
  func.func @kernel(%arg0: i32, %arg1: memref<1x8x16x1xf32, #tpu.memory_space<vmem>>, %arg2: memref<9x2xf32, #tpu.memory_space<vmem>>, %arg3: memref<1x2xf32, #tpu.memory_space<vmem>>, %arg4: memref<1x2xf32, #tpu.memory_space<vmem>>, %arg5: memref<1x8x16x2xf32, #tpu.memory_space<vmem>>, %arg6: memref<10x18x1xf32, #tpu.memory_space<vmem>>) attributes {dimension_semantics = [#tpu.dimension_semantics<parallel>], iteration_bounds = array<i64: 2>, scalar_prefetch = 0 : i64, scratch_operands = 1 : i64, tpu.core_type = #tpu.core_type<tc>, window_params = [{transform_indices = @transform_0, window_bounds = array<i64: 1, 8, 16, 1>}, {pipeline_mode = #tpu.pipeline_mode<synchronous>, transform_indices = @transform_1, window_bounds = array<i64: 9, 2>}, {pipeline_mode = #tpu.pipeline_mode<synchronous>, transform_indices = @transform_2, window_bounds = array<i64: 1, 2>}, {pipeline_mode = #tpu.pipeline_mode<synchronous>, transform_indices = @transform_3, window_bounds = array<i64: 1, 2>}, {transform_indices = @transform_4, window_bounds = array<i64: 1, 8, 16, 2>}]} {
    %cst = arith.constant 0.000000e+00 : f32
    %0 = vector.broadcast %cst : f32 to vector<10x18x1xf32>
    %c0 = arith.constant 0 : index
    %c0_0 = arith.constant 0 : index
    %c0_1 = arith.constant 0 : index
    %1 = vector.load %arg6[%c0, %c0_0, %c0_1] : memref<10x18x1xf32, #tpu.memory_space<vmem>>, vector<10x18x1xf32>
    tpu.vector_store %arg6[%c0, %c0_0, %c0_1], %0 {strides = array<i32>} : memref<10x18x1xf32, #tpu.memory_space<vmem>>, vector<10x18x1xf32>,
    %c0_2 = arith.constant 0 : index
    %c0_3 = arith.constant 0 : index
    %c0_4 = arith.constant 0 : index
    %c0_5 = arith.constant 0 : index
    %2 = vector.load %arg1[%c0_2, %c0_3, %c0_4, %c0_5] : memref<1x8x16x1xf32, #tpu.memory_space<vmem>>, vector<1x8x16x1xf32>
    %3 = vector.shape_cast %2 : vector<1x8x16x1xf32> to vector<8x16x1xf32>
    %c1 = arith.constant 1 : index
    %c1_6 = arith.constant 1 : index
    %c0_7 = arith.constant 0 : index
    %4 = vector.load %arg6[%c1, %c1_6, %c0_7] : memref<10x18x1xf32, #tpu.memory_space<vmem>>, vector<8x16x1xf32>
    tpu.vector_store %arg6[%c1, %c1_6, %c0_7], %3 {strides = array<i32>} : memref<10x18x1xf32, #tpu.memory_space<vmem>>, vector<8x16x1xf32>,
    %c0_8 = arith.constant 0 : index
    %c0_9 = arith.constant 0 : index
    %5 = vector.load %arg2[%c0_8, %c0_9] : memref<9x2xf32, #tpu.memory_space<vmem>>, vector<9x2xf32>
    %cst_10 = arith.constant 0.000000e+00 : f32
    %6 = vector.broadcast %cst_10 : f32 to vector<128x2xf32>
    %c0_11 = arith.constant 0 : index
    %c0_12 = arith.constant 0 : index
    %c0_13 = arith.constant 0 : index
    %7 = vector.load %arg6[%c0_11, %c0_12, %c0_13] : memref<10x18x1xf32, #tpu.memory_space<vmem>>, vector<8x16x1xf32>
    %8 = vector.shape_cast %7 : vector<8x16x1xf32> to vector<128x1xf32>
    %9 = vector.extract_strided_slice %5 {offsets = [0, 0], sizes = [1, 2], strides = [1, 1]} : vector<9x2xf32> to vector<1x2xf32>
    %cst_14 = arith.constant dense<0.000000e+00> : vector<128x2xf32>
    %10 = tpu.matmul %8, %9, %cst_14 {dimension_numbers = #tpu.dot_dimension_numbers<[1], [0], [0], [1], [0, 0, 1, 1], [], []>} : vector<128x1xf32>, vector<1x2xf32>, vector<128x2xf32> -> vector<128x2xf32>
    %11 = arith.addf %6, %10 : vector<128x2xf32>
    %c0_15 = arith.constant 0 : index
    %c1_16 = arith.constant 1 : index
    %c0_17 = arith.constant 0 : index
    %12 = vector.load %arg6[%c0_15, %c1_16, %c0_17] : memref<10x18x1xf32, #tpu.memory_space<vmem>>, vector<8x16x1xf32>
    %13 = vector.shape_cast %12 : vector<8x16x1xf32> to vector<128x1xf32>
    %14 = vector.extract_strided_slice %5 {offsets = [1, 0], sizes = [1, 2], strides = [1, 1]} : vector<9x2xf32> to vector<1x2xf32>
    %cst_18 = arith.constant dense<0.000000e+00> : vector<128x2xf32>
    %15 = tpu.matmul %13, %14, %cst_18 {dimension_numbers = #tpu.dot_dimension_numbers<[1], [0], [0], [1], [0, 0, 1, 1], [], []>} : vector<128x1xf32>, vector<1x2xf32>, vector<128x2xf32> -> vector<128x2xf32>
    %16 = arith.addf %11, %15 : vector<128x2xf32>
    %c0_19 = arith.constant 0 : index
    %c2 = arith.constant 2 : index
    %c0_20 = arith.constant 0 : index
    %17 = vector.load %arg6[%c0_19, %c2, %c0_20] : memref<10x18x1xf32, #tpu.memory_space<vmem>>, vector<8x16x1xf32>
    %18 = vector.shape_cast %17 : vector<8x16x1xf32> to vector<128x1xf32>
    %19 = vector.extract_strided_slice %5 {offsets = [2, 0], sizes = [1, 2], strides = [1, 1]} : vector<9x2xf32> to vector<1x2xf32>
    %cst_21 = arith.constant dense<0.000000e+00> : vector<128x2xf32>
    %20 = tpu.matmul %18, %19, %cst_21 {dimension_numbers = #tpu.dot_dimension_numbers<[1], [0], [0], [1], [0, 0, 1, 1], [], []>} : vector<128x1xf32>, vector<1x2xf32>, vector<128x2xf32> -> vector<128x2xf32>
    %21 = arith.addf %16, %20 : vector<128x2xf32>
    %c1_22 = arith.constant 1 : index
    %c0_23 = arith.constant 0 : index
    %c0_24 = arith.constant 0 : index
    %22 = vector.load %arg6[%c1_22, %c0_23, %c0_24] : memref<10x18x1xf32, #tpu.memory_space<vmem>>, vector<8x16x1xf32>
    %23 = vector.shape_cast %22 : vector<8x16x1xf32> to vector<128x1xf32>
    %24 = vector.extract_strided_slice %5 {offsets = [3, 0], sizes = [1, 2], strides = [1, 1]} : vector<9x2xf32> to vector<1x2xf32>
    %cst_25 = arith.constant dense<0.000000e+00> : vector<128x2xf32>
    %25 = tpu.matmul %23, %24, %cst_25 {dimension_numbers = #tpu.dot_dimension_numbers<[1], [0], [0], [1], [0, 0, 1, 1], [], []>} : vector<128x1xf32>, vector<1x2xf32>, vector<128x2xf32> -> vector<128x2xf32>
    %26 = arith.addf %21, %25 : vector<128x2xf32>
    %c1_26 = arith.constant 1 : index
    %c1_27 = arith.constant 1 : index
    %c0_28 = arith.constant 0 : index
    %27 = vector.load %arg6[%c1_26, %c1_27, %c0_28] : memref<10x18x1xf32, #tpu.memory_space<vmem>>, vector<8x16x1xf32>
    %28 = vector.shape_cast %27 : vector<8x16x1xf32> to vector<128x1xf32>
    %29 = vector.extract_strided_slice %5 {offsets = [4, 0], sizes = [1, 2], strides = [1, 1]} : vector<9x2xf32> to vector<1x2xf32>
    %cst_29 = arith.constant dense<0.000000e+00> : vector<128x2xf32>
    %30 = tpu.matmul %28, %29, %cst_29 {dimension_numbers = #tpu.dot_dimension_numbers<[1], [0], [0], [1], [0, 0, 1, 1], [], []>} : vector<128x1xf32>, vector<1x2xf32>, vector<128x2xf32> -> vector<128x2xf32>
    %31 = arith.addf %26, %30 : vector<128x2xf32>
    %c1_30 = arith.constant 1 : index
    %c2_31 = arith.constant 2 : index
    %c0_32 = arith.constant 0 : index
    %32 = vector.load %arg6[%c1_30, %c2_31, %c0_32] : memref<10x18x1xf32, #tpu.memory_space<vmem>>, vector<8x16x1xf32>
    %33 = vector.shape_cast %32 : vector<8x16x1xf32> to vector<128x1xf32>
    %34 = vector.extract_strided_slice %5 {offsets = [5, 0], sizes = [1, 2], strides = [1, 1]} : vector<9x2xf32> to vector<1x2xf32>
    %cst_33 = arith.constant dense<0.000000e+00> : vector<128x2xf32>
    %35 = tpu.matmul %33, %34, %cst_33 {dimension_numbers = #tpu.dot_dimension_numbers<[1], [0], [0], [1], [0, 0, 1, 1], [], []>} : vector<128x1xf32>, vector<1x2xf32>, vector<128x2xf32> -> vector<128x2xf32>
    %36 = arith.addf %31, %35 : vector<128x2xf32>
    %c2_34 = arith.constant 2 : index
    %c0_35 = arith.constant 0 : index
    %c0_36 = arith.constant 0 : index
    %37 = vector.load %arg6[%c2_34, %c0_35, %c0_36] : memref<10x18x1xf32, #tpu.memory_space<vmem>>, vector<8x16x1xf32>
    %38 = vector.shape_cast %37 : vector<8x16x1xf32> to vector<128x1xf32>
    %39 = vector.extract_strided_slice %5 {offsets = [6, 0], sizes = [1, 2], strides = [1, 1]} : vector<9x2xf32> to vector<1x2xf32>
    %cst_37 = arith.constant dense<0.000000e+00> : vector<128x2xf32>
    %40 = tpu.matmul %38, %39, %cst_37 {dimension_numbers = #tpu.dot_dimension_numbers<[1], [0], [0], [1], [0, 0, 1, 1], [], []>} : vector<128x1xf32>, vector<1x2xf32>, vector<128x2xf32> -> vector<128x2xf32>
    %41 = arith.addf %36, %40 : vector<128x2xf32>
    %c2_38 = arith.constant 2 : index
    %c1_39 = arith.constant 1 : index
    %c0_40 = arith.constant 0 : index
    %42 = vector.load %arg6[%c2_38, %c1_39, %c0_40] : memref<10x18x1xf32, #tpu.memory_space<vmem>>, vector<8x16x1xf32>
    %43 = vector.shape_cast %42 : vector<8x16x1xf32> to vector<128x1xf32>
    %44 = vector.extract_strided_slice %5 {offsets = [7, 0], sizes = [1, 2], strides = [1, 1]} : vector<9x2xf32> to vector<1x2xf32>
    %cst_41 = arith.constant dense<0.000000e+00> : vector<128x2xf32>
    %45 = tpu.matmul %43, %44, %cst_41 {dimension_numbers = #tpu.dot_dimension_numbers<[1], [0], [0], [1], [0, 0, 1, 1], [], []>} : vector<128x1xf32>, vector<1x2xf32>, vector<128x2xf32> -> vector<128x2xf32>
    %46 = arith.addf %41, %45 : vector<128x2xf32>
    %c2_42 = arith.constant 2 : index
    %c2_43 = arith.constant 2 : index
    %c0_44 = arith.constant 0 : index
    %47 = vector.load %arg6[%c2_42, %c2_43, %c0_44] : memref<10x18x1xf32, #tpu.memory_space<vmem>>, vector<8x16x1xf32>
    %48 = vector.shape_cast %47 : vector<8x16x1xf32> to vector<128x1xf32>
    %49 = vector.extract_strided_slice %5 {offsets = [8, 0], sizes = [1, 2], strides = [1, 1]} : vector<9x2xf32> to vector<1x2xf32>
    %cst_45 = arith.constant dense<0.000000e+00> : vector<128x2xf32>
    %50 = tpu.matmul %48, %49, %cst_45 {dimension_numbers = #tpu.dot_dimension_numbers<[1], [0], [0], [1], [0, 0, 1, 1], [], []>} : vector<128x1xf32>, vector<1x2xf32>, vector<128x2xf32> -> vector<128x2xf32>
    %51 = arith.addf %46, %50 : vector<128x2xf32>
    %c0_46 = arith.constant 0 : index
    %c0_47 = arith.constant 0 : index
    %52 = vector.load %arg3[%c0_46, %c0_47] : memref<1x2xf32, #tpu.memory_space<vmem>>, vector<1x2xf32>
    %53 = vector.broadcast %52 : vector<1x2xf32> to vector<128x2xf32>
    %54 = arith.mulf %51, %53 : vector<128x2xf32>
    %c0_48 = arith.constant 0 : index
    %c0_49 = arith.constant 0 : index
    %55 = vector.load %arg4[%c0_48, %c0_49] : memref<1x2xf32, #tpu.memory_space<vmem>>, vector<1x2xf32>
    %56 = vector.broadcast %55 : vector<1x2xf32> to vector<128x2xf32>
    %57 = arith.addf %54, %56 : vector<128x2xf32>
    %cst_50 = arith.constant 0.000000e+00 : f32
    %58 = vector.broadcast %cst_50 : f32 to vector<128x2xf32>
    %59 = arith.maximumf %57, %58 : vector<128x2xf32>
    %60 = vector.shape_cast %59 : vector<128x2xf32> to vector<8x16x2xf32>
    %c0_51 = arith.constant 0 : index
    %c0_52 = arith.constant 0 : index
    %c0_53 = arith.constant 0 : index
    %c0_54 = arith.constant 0 : index
    %61 = vector.load %arg5[%c0_51, %c0_52, %c0_53, %c0_54] : memref<1x8x16x2xf32, #tpu.memory_space<vmem>>, vector<1x8x16x2xf32>
    %62 = vector.shape_cast %61 : vector<1x8x16x2xf32> to vector<8x16x2xf32>
    %63 = vector.shape_cast %60 : vector<8x16x2xf32> to vector<1x8x16x2xf32>
    tpu.vector_store %arg5[%c0_51, %c0_52, %c0_53, %c0_54], %63 {strides = array<i32>} : memref<1x8x16x2xf32, #tpu.memory_space<vmem>>, vector<1x8x16x2xf32>,
    return
  }
  func.func @transform_0(%arg0: i32) -> (i32, i32, i32, i32) {
    %c0_i32 = arith.constant 0 : i32
    %c0_i32_0 = arith.constant 0 : i32
    %c0_i32_1 = arith.constant 0 : i32
    %c0_i32_2 = arith.constant 0 : i32
    return %arg0, %c0_i32, %c0_i32_0, %c0_i32_1 : i32, i32, i32, i32
  }
  func.func @transform_1(%arg0: i32) -> (i32, i32) {
    %c0_i32 = arith.constant 0 : i32
    %c0_i32_0 = arith.constant 0 : i32
    %c0_i32_1 = arith.constant 0 : i32
    return %c0_i32, %c0_i32_0 : i32, i32
  }
  func.func @transform_2(%arg0: i32) -> (i32, i32) {
    %c0_i32 = arith.constant 0 : i32
    %c0_i32_0 = arith.constant 0 : i32
    %c0_i32_1 = arith.constant 0 : i32
    return %c0_i32, %c0_i32_0 : i32, i32
  }
  func.func @transform_3(%arg0: i32) -> (i32, i32) {
    %c0_i32 = arith.constant 0 : i32
    %c0_i32_0 = arith.constant 0 : i32
    %c0_i32_1 = arith.constant 0 : i32
    return %c0_i32, %c0_i32_0 : i32, i32
  }
  func.func @transform_4(%arg0: i32) -> (i32, i32, i32, i32) {
    %c0_i32 = arith.constant 0 : i32
    %c0_i32_0 = arith.constant 0 : i32
    %c0_i32_1 = arith.constant 0 : i32
    %c0_i32_2 = arith.constant 0 : i32
    return %arg0, %c0_i32, %c0_i32_0, %c0_i32_1 : i32, i32, i32, i32
  }
}

</mosaic_0001>

<llo_original>
// kernel: tpu_custom_call.1
$region0: #{tpu_custom_call.1}
  #allocation0 [shape = 'u32[]', space=smem, size = 0x4, offset = 0x4, fixed_abs, tag = 'smem constant byte address 0x4 - core index']
  #allocation1 [shape = 'u32[144,128]{1,0:T(1,128)}', space=vmem, size = 0x12000, scoped, tag = 'internal scratch']
  #allocation2 [shape = 'f32[10,18,1]{2,1,0:T(8,128)}', space=vmem, size = 0x1e000, scoped, tag = 'scratch operand']
  %s0 = inlined_call_operand.vmem [shape: f32[2,8,16,1], index: 0, kind: input, shape index: {}]
  %s1 = inlined_call_operand.vmem [shape: f32[9,2], index: 1, kind: input, shape index: {}]
  %s2 = inlined_call_operand.vmem [shape: f32[1,2], index: 2, kind: input, shape index: {}]
  %s3 = inlined_call_operand.vmem [shape: f32[1,2], index: 3, kind: input, shape index: {}]
  %s4 = inlined_call_operand.vmem [shape: f32[2,8,16,2], index: 4, kind: output, shape index: {}]
  %s5 = sld [smem:[#allocation0]]
  $region49: #{tpu_custom_call.1} parent=0
    _
  %s7 = ssub.s32 1, %s5
  %s8 = scalar_select 0, %s7, %s5
  loop: start=0, step=1, limit=4
  $region2: #{tpu_custom_call.1} parent=0 // loop_pre_header
    _
  $region3: #{tpu_custom_call.1} parent=0 // loop_header
    %s10 = sphi 0, %s14
    %p11 = scmp.ge.s32.totalorder %s10, 4
    %s20 = sphi 0, %s22
    %s23 = sphi 0, %s20
    %s24 = sphi 0, %s23
    %s40 = sphi 0, %s24
    %s44 = sphi 0, %s44
    %s46 = sphi 0, %s44
    %s47 = sphi 0, %s46
    %s61 = sphi 0, %s47
    %s65 = sphi 0, %s65
    %s67 = sphi 0, %s65
    %s68 = sphi 0, %s67
    %s82 = sphi 0, %s68
    %s86 = sphi 0, %s86
    %s88 = sphi 0, %s86
    %s89 = sphi 0, %s88
    %s103 = sphi 0, %s89
    %s109 = sphi 0, %s111
    %s112 = sphi 0, %s109
    %s113 = sphi 0, %s112
    %s129 = sphi 0, %s113
  $region4: #{tpu_custom_call.1} parent=0 // loop_header_branch
    %13 = sbr.rel (%p11) target = $region8
  $region5: #{tpu_custom_call.1} parent=0 // loop_body
    %s15 = ssub.s32 %s10, 1
    %s16 = ssub.s32 %s10, 2
    %s17 = sadd.s32 %s10, 1
    %s18 = ssub.s32 %s10, %s17
    %p19 = scmp.eq.s32.totalorder %s18, 0
    %s21 = sadd.s32 %s20, 1
    %s22 = scalar_select %p19, %s20, %s21
    %p25 = pneg %p19
    %p26 = scmp.eq.s32.totalorder %s10, 1
    %p27 = por %p25, %p26
    %p28 = scmp.ne.s32.totalorder %s20, %s23
    %p29 = scmp.eq.s32.totalorder %s10, 0
    %p30 = por %p28, %p29
    %p31 = scmp.ne.s32.totalorder %s20, %s23
    %p32 = scmp.eq.s32.totalorder %s15, 1
    %p33 = por %p31, %p32
    %p34 = scmp.ne.s32.totalorder %s23, %s24
    %p35 = scmp.eq.s32.totalorder %s15, 0
    %p36 = por %p34, %p35
    %p37 = scmp.ne.s32.totalorder %s23, %s24
    %p38 = scmp.eq.s32.totalorder %s16, 1
    %p39 = por %p37, %p38
    %p41 = scmp.ne.s32.totalorder %s24, %s40
    %p42 = scmp.eq.s32.totalorder %s16, 0
    %p43 = por %p41, %p42
    %s45 = sadd.s32 %s44, 1
    %p48 = scmp.eq.s32.totalorder %s10, 1
    %p49 = scmp.ne.s32.totalorder %s44, %s46
    %p50 = scmp.eq.s32.totalorder %s10, 0
    %p51 = por %p49, %p50
    %p52 = scmp.ne.s32.totalorder %s44, %s46
    %p53 = scmp.eq.s32.totalorder %s15, 1
    %p54 = por %p52, %p53
    %p55 = scmp.ne.s32.totalorder %s46, %s47
    %p56 = scmp.eq.s32.totalorder %s15, 0
    %p57 = por %p55, %p56
    %p58 = scmp.ne.s32.totalorder %s46, %s47
    %p59 = scmp.eq.s32.totalorder %s16, 1
    %p60 = por %p58, %p59
    %p62 = scmp.ne.s32.totalorder %s47, %s61
    %p63 = scmp.eq.s32.totalorder %s16, 0
    %p64 = por %p62, %p63
    %s66 = sadd.s32 %s65, 1
    %p69 = scmp.eq.s32.totalorder %s10, 1
    %p70 = scmp.ne.s32.totalorder %s65, %s67
    %p71 = scmp.eq.s32.totalorder %s10, 0
    %p72 = por %p70, %p71
    %p73 = scmp.ne.s32.totalorder %s65, %s67
    %p74 = scmp.eq.s32.totalorder %s15, 1
    %p75 = por %p73, %p74
    %p76 = scmp.ne.s32.totalorder %s67, %s68
    %p77 = scmp.eq.s32.totalorder %s15, 0
    %p78 = por %p76, %p77
    %p79 = scmp.ne.s32.totalorder %s67, %s68
    %p80 = scmp.eq.s32.totalorder %s16, 1
    %p81 = por %p79, %p80
    %p83 = scmp.ne.s32.totalorder %s68, %s82
    %p84 = scmp.eq.s32.totalorder %s16, 0
    %p85 = por %p83, %p84
    %s87 = sadd.s32 %s86, 1
    %p90 = scmp.eq.s32.totalorder %s10, 1
    %p91 = scmp.ne.s32.totalorder %s86, %s88
    %p92 = scmp.eq.s32.totalorder %s10, 0
    %p93 = por %p91, %p92
    %p94 = scmp.ne.s32.totalorder %s86, %s88
    %p95 = scmp.eq.s32.totalorder %s15, 1
    %p96 = por %p94, %p95
    %p97 = scmp.ne.s32.totalorder %s88, %s89
    %p98 = scmp.eq.s32.totalorder %s15, 0
    %p99 = por %p97, %p98
    %p100 = scmp.ne.s32.totalorder %s88, %s89
    %p101 = scmp.eq.s32.totalorder %s16, 1
    %p102 = por %p100, %p101
    %p104 = scmp.ne.s32.totalorder %s89, %s103
    %p105 = scmp.eq.s32.totalorder %s16, 0
    %p106 = por %p104, %p105
    %s107 = ssub.s32 %s10, %s17
    %p108 = scmp.eq.s32.totalorder %s107, 0
    %s110 = sadd.s32 %s109, 1
    %s111 = scalar_select %p108, %s109, %s110
    %p114 = pneg %p108
    %p115 = scmp.eq.s32.totalorder %s10, 1
    %p116 = por %p114, %p115
    %p117 = scmp.ne.s32.totalorder %s109, %s112
    %p118 = scmp.eq.s32.totalorder %s10, 0
    %p119 = por %p117, %p118
    %p120 = scmp.ne.s32.totalorder %s109, %s112
    %p121 = scmp.eq.s32.totalorder %s15, 1
    %p122 = por %p120, %p121
    %p123 = scmp.ne.s32.totalorder %s112, %s113
    %p124 = scmp.eq.s32.totalorder %s15, 0
    %p125 = por %p123, %p124
    %p126 = scmp.ne.s32.totalorder %s112, %s113
    %p127 = scmp.eq.s32.totalorder %s16, 1
    %p128 = por %p126, %p127
    %p130 = scmp.ne.s32.totalorder %s113, %s129
    %p131 = scmp.eq.s32.totalorder %s16, 0
    %p132 = por %p130, %p131
    %p133 = scmp.le.s32.totalorder 1, %s10
    %p134 = scmp.lt.s32.totalorder %s10, 3
    %p135 = pnand %p133, %p134
    %p136 = pneg %p135
    // Predicated region
    $region9: #{tpu_custom_call.1} parent=5 // pred_check
      _
    $region10: #{tpu_custom_call.1} parent=5 // pred_check_branch
      %138 = sbr.rel (%p135) target = $region12
    $region11: #{tpu_custom_call.1} parent=5 // pred_region
      %s139 = ssub.s32 %s10, 1
      // Predicated region
      $region13: #{tpu_custom_call.1} parent=11 // pred_check
        %p140 = pneg %p57
      $region14: #{tpu_custom_call.1} parent=11 // pred_check_branch
        %142 = sbr.rel (%p140) target = $region16
      $region15: #{tpu_custom_call.1} parent=11 // pred_region
        _
      $region16: #{tpu_custom_call.1} parent=11 // pred_fallthru
        _
      // Predicated region
      $region17: #{tpu_custom_call.1} parent=11 // pred_check
        %p143 = pneg %p78
      $region18: #{tpu_custom_call.1} parent=11 // pred_check_branch
        %145 = sbr.rel (%p143) target = $region20
      $region19: #{tpu_custom_call.1} parent=11 // pred_region
        _
      $region20: #{tpu_custom_call.1} parent=11 // pred_fallthru
        _
      // Predicated region
      $region21: #{tpu_custom_call.1} parent=11 // pred_check
        %p146 = pneg %p99
      $region22: #{tpu_custom_call.1} parent=11 // pred_check_branch
        %148 = sbr.rel (%p146) target = $region24
      $region23: #{tpu_custom_call.1} parent=11 // pred_region
        _
      $region24: #{tpu_custom_call.1} parent=11 // pred_fallthru
        _
    $region12: #{tpu_custom_call.1} parent=5 // pred_fallthru
      _
    %p149 = scmp.lt.s32.totalorder %s10, 2
    // Predicated region
    $region25: #{tpu_custom_call.1} parent=5 // pred_check
      %p150 = pneg %p149
    $region26: #{tpu_custom_call.1} parent=5 // pred_check_branch
      %152 = sbr.rel (%p150) target = $region28
    $region27: #{tpu_custom_call.1} parent=5 // pred_region
      // Predicated region
      $region29: #{tpu_custom_call.1} parent=27 // pred_check
        %p153 = pneg %p30
      $region30: #{tpu_custom_call.1} parent=27 // pred_check_branch
        %155 = sbr.rel (%p153) target = $region32
      $region31: #{tpu_custom_call.1} parent=27 // pred_region
        %p156 = scmp.lt.s32.totalorder %s10, 1
        %s157 = scalar_select %p156, %s10, 1
        %s158 = smul.addr %s157, 16
        %s159 = smul.addr %s158, 8
        %s160 = scalar_lea.vmem %s0, %s159
      $region32: #{tpu_custom_call.1} parent=27 // pred_fallthru
        _
    $region28: #{tpu_custom_call.1} parent=5 // pred_fallthru
      _
    %p161 = scmp.le.s32.totalorder 1, %s10
    %p162 = scmp.lt.s32.totalorder %s10, 3
    %p163 = pnand %p161, %p162
    %p164 = pneg %p163
    // Predicated region
    $region33: #{tpu_custom_call.1} parent=5 // pred_check
      _
    $region34: #{tpu_custom_call.1} parent=5 // pred_check_branch
      %166 = sbr.rel (%p163) target = $region36
    $region35: #{tpu_custom_call.1} parent=5 // pred_region
      %s167 = ssub.s32 %s10, 1
      %p168 = scmp.lt.s32.totalorder %s15, 1
      %s169 = scalar_select %p168, %s15, 1
      %s170 = smul.addr %s169, 16
      %s171 = smul.addr %s170, 8
      %s172 = scalar_lea.vmem %s0, %s171
      %p173 = pneg %p36
      %p174 = pneg %p33
      %p175 = pneg %p57
      %p176 = pneg %p54
      %p177 = pneg %p78
      %p178 = pneg %p75
      %p179 = pneg %p99
      %p180 = pneg %p96
      %p181 = pneg %p125
      %p182 = pneg %p122
      %p183 = scmp.lt.s32.totalorder %s15, 1
      %s184 = scalar_select %p183, %s15, 1
      %s185 = smul.addr %s184, 16
      %s186 = smul.addr %s185, 8
      %s187 = scalar_lea.vmem %s4, %s186
      %p188 = scmp.lt.s32.totalorder %s15, 1
      %s189 = scalar_select %p188, %s15, 1
      %s190 = smul.addr %s189, 16
      %s191 = smul.addr %s190, 8
      %s192 = scalar_lea.vmem %s0, %s191
      %p193 = scmp.lt.s32.totalorder %s15, 1
      %s194 = scalar_select %p193, %s15, 1
      %s195 = smul.addr %s194, 16
      %s196 = smul.addr %s195, 8
      %s197 = scalar_lea.vmem %s4, %s196
      %vm198 = vcmask 7168
      %199 = vst.msk [vmem:[#allocation2] sm:$0xff] %vm198, 0.0
      %200 = vst.msk [vmem:[#allocation2 + $0x8] sm:$0xff] %vm198, 0.0
      %vm201 = vcmask 1024
      %202 = vst.msk [vmem:[#allocation2 + $0x10] sm:$0x3] %vm201, 0.0
      %203 = vst.msk [vmem:[#allocation2 + $0x18] sm:$0xff] %vm198, 0.0
      %204 = vst.msk [vmem:[#allocation2 + $0x20] sm:$0xff] %vm198, 0.0
      %205 = vst.msk [vmem:[#allocation2 + $0x28] sm:$0x3] %vm201, 0.0
      %206 = vst.msk [vmem:[#allocation2 + $0x30] sm:$0xff] %vm198, 0.0
      %207 = vst.msk [vmem:[#allocation2 + $0x38] sm:$0xff] %vm198, 0.0
      %208 = vst.msk [vmem:[#allocation2 + $0x40] sm:$0x3] %vm201, 0.0
      %209 = vst.msk [vmem:[#allocation2 + $0x48] sm:$0xff] %vm198, 0.0
      %210 = vst.msk [vmem:[#allocation2 + $0x50] sm:$0xff] %vm198, 0.0
      %211 = vst.msk [vmem:[#allocation2 + $0x58] sm:$0x3] %vm201, 0.0
      %212 = vst.msk [vmem:[#allocation2 + $0x60] sm:$0xff] %vm198, 0.0
      %213 = vst.msk [vmem:[#allocation2 + $0x68] sm:$0xff] %vm198, 0.0
      %214 = vst.msk [vmem:[#allocation2 + $0x70] sm:$0x3] %vm201, 0.0
      %215 = vst.msk [vmem:[#allocation2 + $0x78] sm:$0xff] %vm198, 0.0
      %216 = vst.msk [vmem:[#allocation2 + $0x80] sm:$0xff] %vm198, 0.0
      %217 = vst.msk [vmem:[#allocation2 + $0x88] sm:$0x3] %vm201, 0.0
      %218 = vst.msk [vmem:[#allocation2 + $0x90] sm:$0xff] %vm198, 0.0
      %219 = vst.msk [vmem:[#allocation2 + $0x98] sm:$0xff] %vm198, 0.0
      %220 = vst.msk [vmem:[#allocation2 + $0xa0] sm:$0x3] %vm201, 0.0
      %221 = vst.msk [vmem:[#allocation2 + $0xa8] sm:$0xff] %vm198, 0.0
      %222 = vst.msk [vmem:[#allocation2 + $0xb0] sm:$0xff] %vm198, 0.0
      %223 = vst.msk [vmem:[#allocation2 + $0xb8] sm:$0x3] %vm201, 0.0
      %224 = vst.msk [vmem:[#allocation2 + $0xc0] sm:$0xff] %vm198, 0.0
      %225 = vst.msk [vmem:[#allocation2 + $0xc8] sm:$0xff] %vm198, 0.0
      %226 = vst.msk [vmem:[#allocation2 + $0xd0] sm:$0x3] %vm201, 0.0
      %227 = vst.msk [vmem:[#allocation2 + $0xd8] sm:$0xff] %vm198, 0.0
      %228 = vst.msk [vmem:[#allocation2 + $0xe0] sm:$0xff] %vm198, 0.0
      %229 = vst.msk [vmem:[#allocation2 + $0xe8] sm:$0x3] %vm201, 0.0
      %v230 = vld [vmem:[%s192] sm:$0xff]
      %v231 = vld [vmem:[%s192 + $0x8] sm:$0xff]
      %v232 = vld [vmem:[%s192 + $0x10] sm:$0xff]
      %v233 = vld [vmem:[%s192 + $0x18] sm:$0xff]
      %v234 = vld [vmem:[%s192 + $0x20] sm:$0xff]
      %v235 = vld [vmem:[%s192 + $0x28] sm:$0xff]
      %v236 = vld [vmem:[%s192 + $0x30] sm:$0xff]
      %v237 = vld [vmem:[%s192 + $0x38] sm:$0xff]
      %v238 = vld [vmem:[%s192 + $0x40] sm:$0xff]
      %v239 = vld [vmem:[%s192 + $0x48] sm:$0xff]
      %v240 = vld [vmem:[%s192 + $0x50] sm:$0xff]
      %v241 = vld [vmem:[%s192 + $0x58] sm:$0xff]
      %v242 = vld [vmem:[%s192 + $0x60] sm:$0xff]
      %v243 = vld [vmem:[%s192 + $0x68] sm:$0xff]
      %v244 = vld [vmem:[%s192 + $0x70] sm:$0xff]
      %v245 = vld [vmem:[%s192 + $0x78] sm:$0xff]
      %s246 = scalar_lea.vmem [#allocation2], 24
      %247 = vst.msk [vmem:[%s246 + $0x1] sm:$0xff] %vm198, %v230
      %248 = vst.msk [vmem:[%s246 + $0x9] sm:$0xff] %vm198, %v231
      %249 = vst.msk [vmem:[%s246 + $0x19] sm:$0xff] %vm198, %v232
      %250 = vst.msk [vmem:[%s246 + $0x21] sm:$0xff] %vm198, %v233
      %251 = vst.msk [vmem:[%s246 + $0x31] sm:$0xff] %vm198, %v234
      %252 = vst.msk [vmem:[%s246 + $0x39] sm:$0xff] %vm198, %v235
      %253 = vst.msk [vmem:[%s246 + $0x49] sm:$0xff] %vm198, %v236
      %254 = vst.msk [vmem:[%s246 + $0x51] sm:$0xff] %vm198, %v237
      %255 = vst.msk [vmem:[%s246 + $0x61] sm:$0xff] %vm198, %v238
      %256 = vst.msk [vmem:[%s246 + $0x69] sm:$0xff] %vm198, %v239
      %257 = vst.msk [vmem:[%s246 + $0x79] sm:$0xff] %vm198, %v240
      %258 = vst.msk [vmem:[%s246 + $0x81] sm:$0xff] %vm198, %v241
      %259 = vst.msk [vmem:[%s246 + $0x91] sm:$0xff] %vm198, %v242
      %260 = vst.msk [vmem:[%s246 + $0x99] sm:$0xff] %vm198, %v243
      %261 = vst.msk [vmem:[%s246 + $0xa9] sm:$0xff] %vm198, %v244
      %262 = vst.msk [vmem:[%s246 + $0xb1] sm:$0xff] %vm198, %v245
      %v263 = vld [vmem:[%s1] sm:$0xff]
      %v264 = vld [vmem:[%s1 + $0x8] sm:$0x1]
      %v265 = vld [vmem:[#allocation2] sm:$0xff]
      %v266 = vld [vmem:[#allocation2 + $0x8] sm:$0xff]
      %v267 = vld [vmem:[#allocation2 + $0x18] sm:$0xff]
      %v268 = vld [vmem:[#allocation2 + $0x20] sm:$0xff]
      %v269 = vld [vmem:[#allocation2 + $0x30] sm:$0xff]
      %v270 = vld [vmem:[#allocation2 + $0x38] sm:$0xff]
      %v271 = vld [vmem:[#allocation2 + $0x48] sm:$0xff]
      %v272 = vld [vmem:[#allocation2 + $0x50] sm:$0xff]
      %v273 = vld [vmem:[#allocation2 + $0x60] sm:$0xff]
      %v274 = vld [vmem:[#allocation2 + $0x68] sm:$0xff]
      %v275 = vld [vmem:[#allocation2 + $0x78] sm:$0xff]
      %v276 = vld [vmem:[#allocation2 + $0x80] sm:$0xff]
      %v277 = vld [vmem:[#allocation2 + $0x90] sm:$0xff]
      %v278 = vld [vmem:[#allocation2 + $0x98] sm:$0xff]
      %v279 = vld [vmem:[#allocation2 + $0xa8] sm:$0xff]
      %v280 = vld [vmem:[#allocation2 + $0xb0] sm:$0xff]
      %v281 = vld [vmem:[#allocation2 + $0x1] sm:$0xff]
      %v282 = vld [vmem:[#allocation2 + $0x9] sm:$0xff]
      %v283 = vld [vmem:[#allocation2 + $0x19] sm:$0xff]
      %v284 = vld [vmem:[#allocation2 + $0x21] sm:$0xff]
      %v285 = vld [vmem:[#allocation2 + $0x31] sm:$0xff]
      %v286 = vld [vmem:[#allocation2 + $0x39] sm:$0xff]
      %v287 = vld [vmem:[#allocation2 + $0x49] sm:$0xff]
      %v288 = vld [vmem:[#allocation2 + $0x51] sm:$0xff]
      %v289 = vld [vmem:[#allocation2 + $0x61] sm:$0xff]
      %v290 = vld [vmem:[#allocation2 + $0x69] sm:$0xff]
      %v291 = vld [vmem:[#allocation2 + $0x79] sm:$0xff]
      %v292 = vld [vmem:[#allocation2 + $0x81] sm:$0xff]
      %v293 = vld [vmem:[#allocation2 + $0x91] sm:$0xff]
      %v294 = vld [vmem:[#allocation2 + $0x99] sm:$0xff]
      %v295 = vld [vmem:[#allocation2 + $0xa9] sm:$0xff]
      %v296 = vld [vmem:[#allocation2 + $0xb1] sm:$0xff]
      %v298 = vrot.slane %v263, 1
      %v300 = vsel %vm198, %v281, 0
      %v303 = vsel %vm198, %v282, 0
      %v306 = vsel %vm198, %v283, 0
      %v309 = vsel %vm198, %v284, 0
      %v312 = vsel %vm198, %v285, 0
      %v315 = vsel %vm198, %v286, 0
      %v318 = vsel %vm198, %v287, 0
      %v321 = vsel %vm198, %v288, 0
      %v324 = vsel %vm198, %v289, 0
      %v327 = vsel %vm198, %v290, 0
      %v330 = vsel %vm198, %v291, 0
      %v333 = vsel %vm198, %v292, 0
      %v336 = vsel %vm198, %v293, 0
      %v339 = vsel %vm198, %v294, 0
      %v342 = vsel %vm198, %v295, 0
      %v345 = vsel %vm198, %v296, 0
      %vm347 = vcmask 1040384
      %v348 = vsel %vm347, %v298, 0
      %350 = vmatprep.subr.mxu0 0.0
      %351 = vmatpush1.msra.mxu0 %v348
      %352 = vmatprep.subr.mxu0 0.0
      %353 = vmatpush1.msra.mxu0 0.0
      %354 = vmatprep.subr.mxu0 0.0
      %355 = vmatpush1.msra.mxu0 0.0
      %356 = vmatprep.subr.mxu0 0.0
      %357 = vmatpush1.msra.mxu0 0.0
      %358 = vmatprep.subr.mxu0 0.0
      %359 = vmatpush1.msra.mxu0 0.0
      %360 = vmatprep.subr.mxu0 0.0
      %361 = vmatpush1.msra.mxu0 0.0
      %362 = vmatprep.subr.mxu0 0.0
      %363 = vmatpush1.msra.mxu0 0.0
      %364 = vmatprep.subr.mxu0 0.0
      %365 = vmatpush1.msra.mxu0 0.0
      %366 = vmatprep.subr.mxu0 0.0
      %367 = vmatpush1.msra.mxu0 0.0
      %368 = vmatprep.subr.mxu0 0.0
      %369 = vmatpush1.msra.mxu0 0.0
      %370 = vmatprep.subr.mxu0 0.0
      %371 = vmatpush1.msra.mxu0 0.0
      %372 = vmatprep.subr.mxu0 0.0
      %373 = vmatpush1.msra.mxu0 0.0
      %374 = vmatprep.subr.mxu0 0.0
      %375 = vmatpush1.msra.mxu0 0.0
      %376 = vmatprep.subr.mxu0 0.0
      %377 = vmatpush1.msra.mxu0 0.0
      %378 = vmatprep.subr.mxu0 0.0
      %379 = vmatpush1.msra.mxu0 0.0
      %380 = vmatprep.subr.mxu0 0.0
      %381 = vmatpush1.msra.mxu0 0.0
      %382 = vmatprep.subr.mxu0 0.0
      %383 = vmatpush1.msra.mxu0 0.0
      %384 = vmatprep.subr.mxu0 0.0
      %385 = vmatpush1.msra.mxu0 0.0
      %386 = vmatprep.subr.mxu0 0.0
      %387 = vmatpush1.msra.mxu0 0.0
      %388 = vmatprep.subr.mxu0 0.0
      %389 = vmatpush1.msra.mxu0 0.0
      %390 = vmatprep.subr.mxu0 0.0
      %391 = vmatpush1.msra.mxu0 0.0
      %392 = vmatprep.subr.mxu0 0.0
      %393 = vmatpush1.msra.mxu0 0.0
      %394 = vmatprep.subr.mxu0 0.0
      %395 = vmatpush1.msra.mxu0 0.0
      %396 = vmatprep.subr.mxu0 0.0
      %397 = vmatpush1.msra.mxu0 0.0
      %398 = vmatprep.subr.mxu0 0.0
      %399 = vmatpush1.msra.mxu0 0.0
      %400 = vmatprep.subr.mxu0 0.0
      %401 = vmatpush1.msra.mxu0 0.0
      %402 = vmatprep.subr.mxu0 0.0
      %403 = vmatpush1.msra.mxu0 0.0
      %404 = vmatprep.subr.mxu0 0.0
      %405 = vmatpush1.msra.mxu0 0.0
      %406 = vmatprep.subr.mxu0 0.0
      %407 = vmatpush1.msra.mxu0 0.0
      %408 = vmatprep.subr.mxu0 0.0
      %409 = vmatpush1.msra.mxu0 0.0
      %410 = vmatprep.subr.mxu0 0.0
      %411 = vmatpush1.msra.mxu0 0.0
      %412 = vmatprep.subr.mxu0 0.0
      %413 = vmatpush1.msra.mxu0 0.0
      %414 = vmatprep.mubr.f32.mxu0 0.0
      %415 = vmatmul.mubr.f32.gmra.mrb[0].mxu0 %v300
      %v416 = vpop.f32.mrb[0].mxu0
      %v417 = vadd.f32 0.0, %v416
      %v418 = vpop.f32.mrb[0].mxu0
      %419 = vmatprep.mubr.f32.mxu0 0.0
      %420 = vmatmul.mubr.f32.gmra.mrb[0].mxu0 %v303
      %v421 = vpop.f32.mrb[0].mxu0
      %v422 = vadd.f32 0.0, %v421
      %v423 = vpop.f32.mrb[0].mxu0
      %424 = vmatprep.mubr.f32.mxu0 0.0
      %425 = vmatmul.mubr.f32.gmra.mrb[0].mxu0 %v306
      %v426 = vpop.f32.mrb[0].mxu0
      %v427 = vadd.f32 0.0, %v426
      %v428 = vpop.f32.mrb[0].mxu0
      %429 = vmatprep.mubr.f32.mxu0 0.0
      %430 = vmatmul.mubr.f32.gmra.mrb[0].mxu0 %v309
      %v431 = vpop.f32.mrb[0].mxu0
      %v432 = vadd.f32 0.0, %v431
      %v433 = vpop.f32.mrb[0].mxu0
      %434 = vmatprep.mubr.f32.mxu0 0.0
      %435 = vmatmul.mubr.f32.gmra.mrb[0].mxu0 %v312
      %v436 = vpop.f32.mrb[0].mxu0
      %v437 = vadd.f32 0.0, %v436
      %v438 = vpop.f32.mrb[0].mxu0
      %439 = vmatprep.mubr.f32.mxu0 0.0
      %440 = vmatmul.mubr.f32.gmra.mrb[0].mxu0 %v315
      %v441 = vpop.f32.mrb[0].mxu0
      %v442 = vadd.f32 0.0, %v441
      %v443 = vpop.f32.mrb[0].mxu0
      %444 = vmatprep.mubr.f32.mxu0 0.0
      %445 = vmatmul.mubr.f32.gmra.mrb[0].mxu0 %v318
      %v446 = vpop.f32.mrb[0].mxu0
      %v447 = vadd.f32 0.0, %v446
      %v448 = vpop.f32.mrb[0].mxu0
      %449 = vmatprep.mubr.f32.mxu0 0.0
      %450 = vmatmul.mubr.f32.gmra.mrb[0].mxu0 %v321
      %v451 = vpop.f32.mrb[0].mxu0
      %v452 = vadd.f32 0.0, %v451
      %v453 = vpop.f32.mrb[0].mxu0
      %454 = vmatprep.mubr.f32.mxu0 0.0
      %455 = vmatmul.mubr.f32.gmra.mrb[0].mxu0 %v324
      %v456 = vpop.f32.mrb[0].mxu0
      %v457 = vadd.f32 0.0, %v456
      %v458 = vpop.f32.mrb[0].mxu0
      %459 = vmatprep.mubr.f32.mxu0 0.0
      %460 = vmatmul.mubr.f32.gmra.mrb[0].mxu0 %v327
      %v461 = vpop.f32.mrb[0].mxu0
      %v462 = vadd.f32 0.0, %v461
      %v463 = vpop.f32.mrb[0].mxu0
      %464 = vmatprep.mubr.f32.mxu0 0.0
      %465 = vmatmul.mubr.f32.gmra.mrb[0].mxu0 %v330
      %v466 = vpop.f32.mrb[0].mxu0
      %v467 = vadd.f32 0.0, %v466
      %v468 = vpop.f32.mrb[0].mxu0
      %469 = vmatprep.mubr.f32.mxu0 0.0
      %470 = vmatmul.mubr.f32.gmra.mrb[0].mxu0 %v333
      %v471 = vpop.f32.mrb[0].mxu0
      %v472 = vadd.f32 0.0, %v471
      %v473 = vpop.f32.mrb[0].mxu0
      %474 = vmatprep.mubr.f32.mxu0 0.0
      %475 = vmatmul.mubr.f32.gmra.mrb[0].mxu0 %v336
      %v476 = vpop.f32.mrb[0].mxu0
      %v477 = vadd.f32 0.0, %v476
      %v478 = vpop.f32.mrb[0].mxu0
      %479 = vmatprep.mubr.f32.mxu0 0.0
      %480 = vmatmul.mubr.f32.gmra.mrb[0].mxu0 %v339
      %v481 = vpop.f32.mrb[0].mxu0
      %v482 = vadd.f32 0.0, %v481
      %v483 = vpop.f32.mrb[0].mxu0
      %484 = vmatprep.mubr.f32.mxu0 0.0
      %485 = vmatmul.mubr.f32.gmra.mrb[0].mxu0 %v342
      %v486 = vpop.f32.mrb[0].mxu0
      %v487 = vadd.f32 0.0, %v486
      %v488 = vpop.f32.mrb[0].mxu0
      %489 = vmatprep.mubr.f32.mxu0 0.0
      %490 = vmatmul.mubr.f32.gmra.mrb[0].mxu0 %v345
      %v491 = vpop.f32.mrb[0].mxu0
      %v492 = vadd.f32 0.0, %v491
      %v493 = vpop.f32.mrb[0].mxu0
      %494 = vdwg.mxu0
      %v496 = vsel %vm198, %v265, 0
      %v499 = vsel %vm198, %v266, 0
      %v502 = vsel %vm198, %v267, 0
      %v505 = vsel %vm198, %v268, 0
      %v508 = vsel %vm198, %v269, 0
      %v511 = vsel %vm198, %v270, 0
      %v514 = vsel %vm198, %v271, 0
      %v517 = vsel %vm198, %v272, 0
      %v520 = vsel %vm198, %v273, 0
      %v523 = vsel %vm198, %v274, 0
      %v526 = vsel %vm198, %v275, 0
      %v529 = vsel %vm198, %v276, 0
      %v532 = vsel %vm198, %v277, 0
      %v535 = vsel %vm198, %v278, 0
      %v538 = vsel %vm198, %v279, 0
      %v541 = vsel %vm198, %v280, 0
      %v543 = vsel %vm347, %v263, 0
      %545 = vmatprep.subr.mxu0 0.0
      %546 = vmatpush1.msra.mxu0 %v543
      %547 = vmatprep.subr.mxu0 0.0
      %548 = vmatpush1.msra.mxu0 0.0
      %549 = vmatprep.subr.mxu0 0.0
      %550 = vmatpush1.msra.mxu0 0.0
      %551 = vmatprep.subr.mxu0 0.0
      %552 = vmatpush1.msra.mxu0 0.0
      %553 = vmatprep.subr.mxu0 0.0
      %554 = vmatpush1.msra.mxu0 0.0
      %555 = vmatprep.subr.mxu0 0.0
      %556 = vmatpush1.msra.mxu0 0.0
      %557 = vmatprep.subr.mxu0 0.0
      %558 = vmatpush1.msra.mxu0 0.0
      %559 = vmatprep.subr.mxu0 0.0
      %560 = vmatpush1.msra.mxu0 0.0
      %561 = vmatprep.subr.mxu0 0.0
      %562 = vmatpush1.msra.mxu0 0.0
      %563 = vmatprep.subr.mxu0 0.0
      %564 = vmatpush1.msra.mxu0 0.0
      %565 = vmatprep.subr.mxu0 0.0
      %566 = vmatpush1.msra.mxu0 0.0
      %567 = vmatprep.subr.mxu0 0.0
      %568 = vmatpush1.msra.mxu0 0.0
      %569 = vmatprep.subr.mxu0 0.0
      %570 = vmatpush1.msra.mxu0 0.0
      %571 = vmatprep.subr.mxu0 0.0
      %572 = vmatpush1.msra.mxu0 0.0
      %573 = vmatprep.subr.mxu0 0.0
      %574 = vmatpush1.msra.mxu0 0.0
      %575 = vmatprep.subr.mxu0 0.0
      %576 = vmatpush1.msra.mxu0 0.0
      %577 = vmatprep.subr.mxu0 0.0
      %578 = vmatpush1.msra.mxu0 0.0
      %579 = vmatprep.subr.mxu0 0.0
      %580 = vmatpush1.msra.mxu0 0.0
      %581 = vmatprep.subr.mxu0 0.0
      %582 = vmatpush1.msra.mxu0 0.0
      %583 = vmatprep.subr.mxu0 0.0
      %584 = vmatpush1.msra.mxu0 0.0
      %585 = vmatprep.subr.mxu0 0.0
      %586 = vmatpush1.msra.mxu0 0.0
      %587 = vmatprep.subr.mxu0 0.0
      %588 = vmatpush1.msra.mxu0 0.0
      %589 = vmatprep.subr.mxu0 0.0
      %590 = vmatpush1.msra.mxu0 0.0
      %591 = vmatprep.subr.mxu0 0.0
      %592 = vmatpush1.msra.mxu0 0.0
      %593 = vmatprep.subr.mxu0 0.0
      %594 = vmatpush1.msra.mxu0 0.0
      %595 = vmatprep.subr.mxu0 0.0
      %596 = vmatpush1.msra.mxu0 0.0
      %597 = vmatprep.subr.mxu0 0.0
      %598 = vmatpush1.msra.mxu0 0.0
      %599 = vmatprep.subr.mxu0 0.0
      %600 = vmatpush1.msra.mxu0 0.0
      %601 = vmatprep.subr.mxu0 0.0
      %602 = vmatpush1.msra.mxu0 0.0
      %603 = vmatprep.subr.mxu0 0.0
      %604 = vmatpush1.msra.mxu0 0.0
      %605 = vmatprep.subr.mxu0 0.0
      %606 = vmatpush1.msra.mxu0 0.0
      %607 = vmatprep.subr.mxu0 0.0
      %608 = vmatpush1.msra.mxu0 0.0
      %609 = vmatprep.mubr.f32.mxu0 0.0
      %610 = vmatmul.mubr.f32.gmra.mrb[0].mxu0 %v496
      %v611 = vpop.f32.mrb[0].mxu0
      %v612 = vadd.f32 %v417, %v611
      %v613 = vpop.f32.mrb[0].mxu0
      %614 = vmatprep.mubr.f32.mxu0 0.0
      %615 = vmatmul.mubr.f32.gmra.mrb[0].mxu0 %v499
      %v616 = vpop.f32.mrb[0].mxu0
      %v617 = vadd.f32 %v422, %v616
      %v618 = vpop.f32.mrb[0].mxu0
      %619 = vmatprep.mubr.f32.mxu0 0.0
      %620 = vmatmul.mubr.f32.gmra.mrb[0].mxu0 %v502
      %v621 = vpop.f32.mrb[0].mxu0
      %v622 = vadd.f32 %v427, %v621
      %v623 = vpop.f32.mrb[0].mxu0
      %624 = vmatprep.mubr.f32.mxu0 0.0
      %625 = vmatmul.mubr.f32.gmra.mrb[0].mxu0 %v505
      %v626 = vpop.f32.mrb[0].mxu0
      %v627 = vadd.f32 %v432, %v626
      %v628 = vpop.f32.mrb[0].mxu0
      %629 = vmatprep.mubr.f32.mxu0 0.0
      %630 = vmatmul.mubr.f32.gmra.mrb[0].mxu0 %v508
      %v631 = vpop.f32.mrb[0].mxu0
      %v632 = vadd.f32 %v437, %v631
      %v633 = vpop.f32.mrb[0].mxu0
      %634 = vmatprep.mubr.f32.mxu0 0.0
      %635 = vmatmul.mubr.f32.gmra.mrb[0].mxu0 %v511
      %v636 = vpop.f32.mrb[0].mxu0
      %v637 = vadd.f32 %v442, %v636
      %v638 = vpop.f32.mrb[0].mxu0
      %639 = vmatprep.mubr.f32.mxu0 0.0
      %640 = vmatmul.mubr.f32.gmra.mrb[0].mxu0 %v514
      %v641 = vpop.f32.mrb[0].mxu0
      %v642 = vadd.f32 %v447, %v641
      %v643 = vpop.f32.mrb[0].mxu0
      %644 = vmatprep.mubr.f32.mxu0 0.0
      %645 = vmatmul.mubr.f32.gmra.mrb[0].mxu0 %v517
      %v646 = vpop.f32.mrb[0].mxu0
      %v647 = vadd.f32 %v452, %v646
      %v648 = vpop.f32.mrb[0].mxu0
      %649 = vmatprep.mubr.f32.mxu0 0.0
      %650 = vmatmul.mubr.f32.gmra.mrb[0].mxu0 %v520
      %v651 = vpop.f32.mrb[0].mxu0
      %v652 = vadd.f32 %v457, %v651
      %v653 = vpop.f32.mrb[0].mxu0
      %654 = vmatprep.mubr.f32.mxu0 0.0
      %655 = vmatmul.mubr.f32.gmra.mrb[0].mxu0 %v523
      %v656 = vpop.f32.mrb[0].mxu0
      %v657 = vadd.f32 %v462, %v656
      %v658 = vpop.f32.mrb[0].mxu0
      %659 = vmatprep.mubr.f32.mxu0 0.0
      %660 = vmatmul.mubr.f32.gmra.mrb[0].mxu0 %v526
      %v661 = vpop.f32.mrb[0].mxu0
      %v662 = vadd.f32 %v467, %v661
      %v663 = vpop.f32.mrb[0].mxu0
      %664 = vmatprep.mubr.f32.mxu0 0.0
      %665 = vmatmul.mubr.f32.gmra.mrb[0].mxu0 %v529
      %v666 = vpop.f32.mrb[0].mxu0
      %v667 = vadd.f32 %v472, %v666
      %v668 = vpop.f32.mrb[0].mxu0
      %669 = vmatprep.mubr.f32.mxu0 0.0
      %670 = vmatmul.mubr.f32.gmra.mrb[0].mxu0 %v532
      %v671 = vpop.f32.mrb[0].mxu0
      %v672 = vadd.f32 %v477, %v671
      %v673 = vpop.f32.mrb[0].mxu0
      %674 = vmatprep.mubr.f32.mxu0 0.0
      %675 = vmatmul.mubr.f32.gmra.mrb[0].mxu0 %v535
      %v676 = vpop.f32.mrb[0].mxu0
      %v677 = vadd.f32 %v482, %v676
      %v678 = vpop.f32.mrb[0].mxu0
      %679 = vmatprep.mubr.f32.mxu0 0.0
      %680 = vmatmul.mubr.f32.gmra.mrb[0].mxu0 %v538
      %v681 = vpop.f32.mrb[0].mxu0
      %v682 = vadd.f32 %v487, %v681
      %v683 = vpop.f32.mrb[0].mxu0
      %684 = vmatprep.mubr.f32.mxu0 0.0
      %685 = vmatmul.mubr.f32.gmra.mrb[0].mxu0 %v541
      %v686 = vpop.f32.mrb[0].mxu0
      %v687 = vadd.f32 %v492, %v686
      %v688 = vpop.f32.mrb[0].mxu0
      %689 = vdwg.mxu0
      %v690 = vld [vmem:[#allocation2 + $0x2] sm:$0xff]
      %v691 = vld [vmem:[#allocation2 + $0xa] sm:$0xff]
      %v692 = vld [vmem:[#allocation2 + $0x1a] sm:$0xff]
      %v693 = vld [vmem:[#allocation2 + $0x22] sm:$0xff]
      %v694 = vld [vmem:[#allocation2 + $0x32] sm:$0xff]
      %v695 = vld [vmem:[#allocation2 + $0x3a] sm:$0xff]
      %v696 = vld [vmem:[#allocation2 + $0x4a] sm:$0xff]
      %v697 = vld [vmem:[#allocation2 + $0x52] sm:$0xff]
      %v698 = vld [vmem:[#allocation2 + $0x62] sm:$0xff]
      %v699 = vld [vmem:[#allocation2 + $0x6a] sm:$0xff]
      %v700 = vld [vmem:[#allocation2 + $0x7a] sm:$0xff]
      %v701 = vld [vmem:[#allocation2 + $0x82] sm:$0xff]
      %v702 = vld [vmem:[#allocation2 + $0x92] sm:$0xff]
      %v703 = vld [vmem:[#allocation2 + $0x9a] sm:$0xff]
      %v704 = vld [vmem:[#allocation2 + $0xaa] sm:$0xff]
      %v705 = vld [vmem:[#allocation2 + $0xb2] sm:$0xff]
      %v706 = vrot.slane %v263, 2
      %v708 = vsel %vm198, %v690, 0
      %v711 = vsel %vm198, %v691, 0
      %v714 = vsel %vm198, %v692, 0
      %v717 = vsel %vm198, %v693, 0
      %v720 = vsel %vm198, %v694, 0
      %v723 = vsel %vm198, %v695, 0
      %v726 = vsel %vm198, %v696, 0
      %v729 = vsel %vm198, %v697, 0
      %v732 = vsel %vm198, %v698, 0
      %v735 = vsel %vm198, %v699, 0
      %v738 = vsel %vm198, %v700, 0
      %v741 = vsel %vm198, %v701, 0
      %v744 = vsel %vm198, %v702, 0
      %v747 = vsel %vm198, %v703, 0
      %v750 = vsel %vm198, %v704, 0
      %v753 = vsel %vm198, %v705, 0
      %v755 = vsel %vm347, %v706, 0
      %757 = vmatprep.subr.mxu0 0.0
      %758 = vmatpush1.msra.mxu0 %v755
      %759 = vmatprep.subr.mxu0 0.0
      %760 = vmatpush1.msra.mxu0 0.0
      %761 = vmatprep.subr.mxu0 0.0
      %762 = vmatpush1.msra.mxu0 0.0
      %763 = vmatprep.subr.mxu0 0.0
      %764 = vmatpush1.msra.mxu0 0.0
      %765 = vmatprep.subr.mxu0 0.0
      %766 = vmatpush1.msra.mxu0 0.0
      %767 = vmatprep.subr.mxu0 0.0
      %768 = vmatpush1.msra.mxu0 0.0
      %769 = vmatprep.subr.mxu0 0.0
      %770 = vmatpush1.msra.mxu0 0.0
      %771 = vmatprep.subr.mxu0 0.0
      %772 = vmatpush1.msra.mxu0 0.0
      %773 = vmatprep.subr.mxu0 0.0
      %774 = vmatpush1.msra.mxu0 0.0
      %775 = vmatprep.subr.mxu0 0.0
      %776 = vmatpush1.msra.mxu0 0.0
      %777 = vmatprep.subr.mxu0 0.0
      %778 = vmatpush1.msra.mxu0 0.0
      %779 = vmatprep.subr.mxu0 0.0
      %780 = vmatpush1.msra.mxu0 0.0
      %781 = vmatprep.subr.mxu0 0.0
      %782 = vmatpush1.msra.mxu0 0.0
      %783 = vmatprep.subr.mxu0 0.0
      %784 = vmatpush1.msra.mxu0 0.0
      %785 = vmatprep.subr.mxu0 0.0
      %786 = vmatpush1.msra.mxu0 0.0
      %787 = vmatprep.subr.mxu0 0.0
      %788 = vmatpush1.msra.mxu0 0.0
      %789 = vmatprep.subr.mxu0 0.0
      %790 = vmatpush1.msra.mxu0 0.0
      %791 = vmatprep.subr.mxu0 0.0
      %792 = vmatpush1.msra.mxu0 0.0
      %793 = vmatprep.subr.mxu0 0.0
      %794 = vmatpush1.msra.mxu0 0.0
      %795 = vmatprep.subr.mxu0 0.0
      %796 = vmatpush1.msra.mxu0 0.0
      %797 = vmatprep.subr.mxu0 0.0
      %798 = vmatpush1.msra.mxu0 0.0
      %799 = vmatprep.subr.mxu0 0.0
      %800 = vmatpush1.msra.mxu0 0.0
      %801 = vmatprep.subr.mxu0 0.0
      %802 = vmatpush1.msra.mxu0 0.0
      %803 = vmatprep.subr.mxu0 0.0
      %804 = vmatpush1.msra.mxu0 0.0
      %805 = vmatprep.subr.mxu0 0.0
      %806 = vmatpush1.msra.mxu0 0.0
      %807 = vmatprep.subr.mxu0 0.0
      %808 = vmatpush1.msra.mxu0 0.0
      %809 = vmatprep.subr.mxu0 0.0
      %810 = vmatpush1.msra.mxu0 0.0
      %811 = vmatprep.subr.mxu0 0.0
      %812 = vmatpush1.msra.mxu0 0.0
      %813 = vmatprep.subr.mxu0 0.0
      %814 = vmatpush1.msra.mxu0 0.0
      %815 = vmatprep.subr.mxu0 0.0
      %816 = vmatpush1.msra.mxu0 0.0
      %817 = vmatprep.subr.mxu0 0.0
      %818 = vmatpush1.msra.mxu0 0.0
      %819 = vmatprep.subr.mxu0 0.0
      %820 = vmatpush1.msra.mxu0 0.0
      %821 = vmatprep.mubr.f32.mxu0 0.0
      %822 = vmatmul.mubr.f32.gmra.mrb[0].mxu0 %v708
      %v823 = vpop.f32.mrb[0].mxu0
      %v824 = vadd.f32 0.0, %v823
      %v825 = vpop.f32.mrb[0].mxu0
      %826 = vmatprep.mubr.f32.mxu0 0.0
      %827 = vmatmul.mubr.f32.gmra.mrb[0].mxu0 %v711
      %v828 = vpop.f32.mrb[0].mxu0
      %v829 = vadd.f32 0.0, %v828
      %v830 = vpop.f32.mrb[0].mxu0
      %831 = vmatprep.mubr.f32.mxu0 0.0
      %832 = vmatmul.mubr.f32.gmra.mrb[0].mxu0 %v714
      %v833 = vpop.f32.mrb[0].mxu0
      %v834 = vadd.f32 0.0, %v833
      %v835 = vpop.f32.mrb[0].mxu0
      %836 = vmatprep.mubr.f32.mxu0 0.0
      %837 = vmatmul.mubr.f32.gmra.mrb[0].mxu0 %v717
      %v838 = vpop.f32.mrb[0].mxu0
      %v839 = vadd.f32 0.0, %v838
      %v840 = vpop.f32.mrb[0].mxu0
      %841 = vmatprep.mubr.f32.mxu0 0.0
      %842 = vmatmul.mubr.f32.gmra.mrb[0].mxu0 %v720
      %v843 = vpop.f32.mrb[0].mxu0
      %v844 = vadd.f32 0.0, %v843
      %v845 = vpop.f32.mrb[0].mxu0
      %846 = vmatprep.mubr.f32.mxu0 0.0
      %847 = vmatmul.mubr.f32.gmra.mrb[0].mxu0 %v723
      %v848 = vpop.f32.mrb[0].mxu0
      %v849 = vadd.f32 0.0, %v848
      %v850 = vpop.f32.mrb[0].mxu0
      %851 = vmatprep.mubr.f32.mxu0 0.0
      %852 = vmatmul.mubr.f32.gmra.mrb[0].mxu0 %v726
      %v853 = vpop.f32.mrb[0].mxu0
      %v854 = vadd.f32 0.0, %v853
      %v855 = vpop.f32.mrb[0].mxu0
      %856 = vmatprep.mubr.f32.mxu0 0.0
      %857 = vmatmul.mubr.f32.gmra.mrb[0].mxu0 %v729
      %v858 = vpop.f32.mrb[0].mxu0
      %v859 = vadd.f32 0.0, %v858
      %v860 = vpop.f32.mrb[0].mxu0
      %861 = vmatprep.mubr.f32.mxu0 0.0
      %862 = vmatmul.mubr.f32.gmra.mrb[0].mxu0 %v732
      %v863 = vpop.f32.mrb[0].mxu0
      %v864 = vadd.f32 0.0, %v863
      %v865 = vpop.f32.mrb[0].mxu0
      %866 = vmatprep.mubr.f32.mxu0 0.0
      %867 = vmatmul.mubr.f32.gmra.mrb[0].mxu0 %v735
      %v868 = vpop.f32.mrb[0].mxu0
      %v869 = vadd.f32 0.0, %v868
      %v870 = vpop.f32.mrb[0].mxu0
      %871 = vmatprep.mubr.f32.mxu0 0.0
      %872 = vmatmul.mubr.f32.gmra.mrb[0].mxu0 %v738
      %v873 = vpop.f32.mrb[0].mxu0
      %v874 = vadd.f32 0.0, %v873
      %v875 = vpop.f32.mrb[0].mxu0
      %876 = vmatprep.mubr.f32.mxu0 0.0
      %877 = vmatmul.mubr.f32.gmra.mrb[0].mxu0 %v741
      %v878 = vpop.f32.mrb[0].mxu0
      %v879 = vadd.f32 0.0, %v878
      %v880 = vpop.f32.mrb[0].mxu0
      %881 = vmatprep.mubr.f32.mxu0 0.0
      %882 = vmatmul.mubr.f32.gmra.mrb[0].mxu0 %v744
      %v883 = vpop.f32.mrb[0].mxu0
      %v884 = vadd.f32 0.0, %v883
      %v885 = vpop.f32.mrb[0].mxu0
      %886 = vmatprep.mubr.f32.mxu0 0.0
      %887 = vmatmul.mubr.f32.gmra.mrb[0].mxu0 %v747
      %v888 = vpop.f32.mrb[0].mxu0
      %v889 = vadd.f32 0.0, %v888
      %v890 = vpop.f32.mrb[0].mxu0
      %891 = vmatprep.mubr.f32.mxu0 0.0
      %892 = vmatmul.mubr.f32.gmra.mrb[0].mxu0 %v750
      %v893 = vpop.f32.mrb[0].mxu0
      %v894 = vadd.f32 0.0, %v893
      %v895 = vpop.f32.mrb[0].mxu0
      %896 = vmatprep.mubr.f32.mxu0 0.0
      %897 = vmatmul.mubr.f32.gmra.mrb[0].mxu0 %v753
      %v898 = vpop.f32.mrb[0].mxu0
      %v899 = vadd.f32 0.0, %v898
      %v900 = vpop.f32.mrb[0].mxu0
      %901 = vdwg.mxu0
      %v902 = vadd.f32 %v612, %v824
      %v903 = vadd.f32 %v617, %v829
      %v904 = vadd.f32 %v622, %v834
      %v905 = vadd.f32 %v627, %v839
      %v906 = vadd.f32 %v632, %v844
      %v907 = vadd.f32 %v637, %v849
      %v908 = vadd.f32 %v642, %v854
      %v909 = vadd.f32 %v647, %v859
      %v910 = vadd.f32 %v652, %v864
      %v911 = vadd.f32 %v657, %v869
      %v912 = vadd.f32 %v662, %v874
      %v913 = vadd.f32 %v667, %v879
      %v914 = vadd.f32 %v672, %v884
      %v915 = vadd.f32 %v677, %v889
      %v916 = vadd.f32 %v682, %v894
      %v917 = vadd.f32 %v687, %v899
      %v918 = vld [vmem:[%s246] sm:$0xff]
      %v919 = vld [vmem:[%s246 + $0x8] sm:$0xff]
      %v920 = vld [vmem:[%s246 + $0x18] sm:$0xff]
      %v921 = vld [vmem:[%s246 + $0x20] sm:$0xff]
      %v922 = vld [vmem:[%s246 + $0x30] sm:$0xff]
      %v923 = vld [vmem:[%s246 + $0x38] sm:$0xff]
      %v924 = vld [vmem:[%s246 + $0x48] sm:$0xff]
      %v925 = vld [vmem:[%s246 + $0x50] sm:$0xff]
      %v926 = vld [vmem:[%s246 + $0x60] sm:$0xff]
      %v927 = vld [vmem:[%s246 + $0x68] sm:$0xff]
      %v928 = vld [vmem:[%s246 + $0x78] sm:$0xff]
      %v929 = vld [vmem:[%s246 + $0x80] sm:$0xff]
      %v930 = vld [vmem:[%s246 + $0x90] sm:$0xff]
      %v931 = vld [vmem:[%s246 + $0x98] sm:$0xff]
      %v932 = vld [vmem:[%s246 + $0xa8] sm:$0xff]
      %v933 = vld [vmem:[%s246 + $0xb0] sm:$0xff]
      %v934 = vrot.slane %v263, 3
      %v936 = vsel %vm198, %v918, 0
      %v939 = vsel %vm198, %v919, 0
      %v942 = vsel %vm198, %v920, 0
      %v945 = vsel %vm198, %v921, 0
      %v948 = vsel %vm198, %v922, 0
      %v951 = vsel %vm198, %v923, 0
      %v954 = vsel %vm198, %v924, 0
      %v957 = vsel %vm198, %v925, 0
      %v960 = vsel %vm198, %v926, 0
      %v963 = vsel %vm198, %v927, 0
      %v966 = vsel %vm198, %v928, 0
      %v969 = vsel %vm198, %v929, 0
      %v972 = vsel %vm198, %v930, 0
      %v975 = vsel %vm198, %v931, 0
      %v978 = vsel %vm198, %v932, 0
      %v981 = vsel %vm198, %v933, 0
      %v983 = vsel %vm347, %v934, 0
      %985 = vmatprep.subr.mxu0 0.0
      %986 = vmatpush1.msra.mxu0 %v983
      %987 = vmatprep.subr.mxu0 0.0
      %988 = vmatpush1.msra.mxu0 0.0
      %989 = vmatprep.subr.mxu0 0.0
      %990 = vmatpush1.msra.mxu0 0.0
      %991 = vmatprep.subr.mxu0 0.0
      %992 = vmatpush1.msra.mxu0 0.0
      %993 = vmatprep.subr.mxu0 0.0
      %994 = vmatpush1.msra.mxu0 0.0
      %995 = vmatprep.subr.mxu0 0.0
      %996 = vmatpush1.msra.mxu0 0.0
      %997 = vmatprep.subr.mxu0 0.0
      %998 = vmatpush1.msra.mxu0 0.0
      %999 = vmatprep.subr.mxu0 0.0
      %1000 = vmatpush1.msra.mxu0 0.0
      %1001 = vmatprep.subr.mxu0 0.0
      %1002 = vmatpush1.msra.mxu0 0.0
      %1003 = vmatprep.subr.mxu0 0.0
      %1004 = vmatpush1.msra.mxu0 0.0
      %1005 = vmatprep.subr.mxu0 0.0
      %1006 = vmatpush1.msra.mxu0 0.0
      %1007 = vmatprep.subr.mxu0 0.0
      %1008 = vmatpush1.msra.mxu0 0.0
      %1009 = vmatprep.subr.mxu0 0.0
      %1010 = vmatpush1.msra.mxu0 0.0
      %1011 = vmatprep.subr.mxu0 0.0
      %1012 = vmatpush1.msra.mxu0 0.0
      %1013 = vmatprep.subr.mxu0 0.0
      %1014 = vmatpush1.msra.mxu0 0.0
      %1015 = vmatprep.subr.mxu0 0.0
      %1016 = vmatpush1.msra.mxu0 0.0
      %1017 = vmatprep.subr.mxu0 0.0
      %1018 = vmatpush1.msra.mxu0 0.0
      %1019 = vmatprep.subr.mxu0 0.0
      %1020 = vmatpush1.msra.mxu0 0.0
      %1021 = vmatprep.subr.mxu0 0.0
      %1022 = vmatpush1.msra.mxu0 0.0
      %1023 = vmatprep.subr.mxu0 0.0
      %1024 = vmatpush1.msra.mxu0 0.0
      %1025 = vmatprep.subr.mxu0 0.0
      %1026 = vmatpush1.msra.mxu0 0.0
      %1027 = vmatprep.subr.mxu0 0.0
      %1028 = vmatpush1.msra.mxu0 0.0
      %1029 = vmatprep.subr.mxu0 0.0
      %1030 = vmatpush1.msra.mxu0 0.0
      %1031 = vmatprep.subr.mxu0 0.0
      %1032 = vmatpush1.msra.mxu0 0.0
      %1033 = vmatprep.subr.mxu0 0.0
      %1034 = vmatpush1.msra.mxu0 0.0
      %1035 = vmatprep.subr.mxu0 0.0
      %1036 = vmatpush1.msra.mxu0 0.0
      %1037 = vmatprep.subr.mxu0 0.0
      %1038 = vmatpush1.msra.mxu0 0.0
      %1039 = vmatprep.subr.mxu0 0.0
      %1040 = vmatpush1.msra.mxu0 0.0
      %1041 = vmatprep.subr.mxu0 0.0
      %1042 = vmatpush1.msra.mxu0 0.0
      %1043 = vmatprep.subr.mxu0 0.0
      %1044 = vmatpush1.msra.mxu0 0.0
      %1045 = vmatprep.subr.mxu0 0.0
      %1046 = vmatpush1.msra.mxu0 0.0
      %1047 = vmatprep.subr.mxu0 0.0
      %1048 = vmatpush1.msra.mxu0 0.0
      %1049 = vmatprep.mubr.f32.mxu0 0.0
      %1050 = vmatmul.mubr.f32.gmra.mrb[0].mxu0 %v936
      %v1051 = vpop.f32.mrb[0].mxu0
      %v1052 = vadd.f32 0.0, %v1051
      %v1053 = vpop.f32.mrb[0].mxu0
      %1054 = vmatprep.mubr.f32.mxu0 0.0
      %1055 = vmatmul.mubr.f32.gmra.mrb[0].mxu0 %v939
      %v1056 = vpop.f32.mrb[0].mxu0
      %v1057 = vadd.f32 0.0, %v1056
      %v1058 = vpop.f32.mrb[0].mxu0
      %1059 = vmatprep.mubr.f32.mxu0 0.0
      %1060 = vmatmul.mubr.f32.gmra.mrb[0].mxu0 %v942
      %v1061 = vpop.f32.mrb[0].mxu0
      %v1062 = vadd.f32 0.0, %v1061
      %v1063 = vpop.f32.mrb[0].mxu0
      %1064 = vmatprep.mubr.f32.mxu0 0.0
      %1065 = vmatmul.mubr.f32.gmra.mrb[0].mxu0 %v945
      %v1066 = vpop.f32.mrb[0].mxu0
      %v1067 = vadd.f32 0.0, %v1066
      %v1068 = vpop.f32.mrb[0].mxu0
      %1069 = vmatprep.mubr.f32.mxu0 0.0
      %1070 = vmatmul.mubr.f32.gmra.mrb[0].mxu0 %v948
      %v1071 = vpop.f32.mrb[0].mxu0
      %v1072 = vadd.f32 0.0, %v1071
      %v1073 = vpop.f32.mrb[0].mxu0
      %1074 = vmatprep.mubr.f32.mxu0 0.0
      %1075 = vmatmul.mubr.f32.gmra.mrb[0].mxu0 %v951
      %v1076 = vpop.f32.mrb[0].mxu0
      %v1077 = vadd.f32 0.0, %v1076
      %v1078 = vpop.f32.mrb[0].mxu0
      %1079 = vmatprep.mubr.f32.mxu0 0.0
      %1080 = vmatmul.mubr.f32.gmra.mrb[0].mxu0 %v954
      %v1081 = vpop.f32.mrb[0].mxu0
      %v1082 = vadd.f32 0.0, %v1081
      %v1083 = vpop.f32.mrb[0].mxu0
      %1084 = vmatprep.mubr.f32.mxu0 0.0
      %1085 = vmatmul.mubr.f32.gmra.mrb[0].mxu0 %v957
      %v1086 = vpop.f32.mrb[0].mxu0
      %v1087 = vadd.f32 0.0, %v1086
      %v1088 = vpop.f32.mrb[0].mxu0
      %1089 = vmatprep.mubr.f32.mxu0 0.0
      %1090 = vmatmul.mubr.f32.gmra.mrb[0].mxu0 %v960
      %v1091 = vpop.f32.mrb[0].mxu0
      %v1092 = vadd.f32 0.0, %v1091
      %v1093 = vpop.f32.mrb[0].mxu0
      %1094 = vmatprep.mubr.f32.mxu0 0.0
      %1095 = vmatmul.mubr.f32.gmra.mrb[0].mxu0 %v963
      %v1096 = vpop.f32.mrb[0].mxu0
      %v1097 = vadd.f32 0.0, %v1096
      %v1098 = vpop.f32.mrb[0].mxu0
      %1099 = vmatprep.mubr.f32.mxu0 0.0
      %1100 = vmatmul.mubr.f32.gmra.mrb[0].mxu0 %v966
      %v1101 = vpop.f32.mrb[0].mxu0
      %v1102 = vadd.f32 0.0, %v1101
      %v1103 = vpop.f32.mrb[0].mxu0
      %1104 = vmatprep.mubr.f32.mxu0 0.0
      %1105 = vmatmul.mubr.f32.gmra.mrb[0].mxu0 %v969
      %v1106 = vpop.f32.mrb[0].mxu0
      %v1107 = vadd.f32 0.0, %v1106
      %v1108 = vpop.f32.mrb[0].mxu0
      %1109 = vmatprep.mubr.f32.mxu0 0.0
      %1110 = vmatmul.mubr.f32.gmra.mrb[0].mxu0 %v972
      %v1111 = vpop.f32.mrb[0].mxu0
      %v1112 = vadd.f32 0.0, %v1111
      %v1113 = vpop.f32.mrb[0].mxu0
      %1114 = vmatprep.mubr.f32.mxu0 0.0
      %1115 = vmatmul.mubr.f32.gmra.mrb[0].mxu0 %v975
      %v1116 = vpop.f32.mrb[0].mxu0
      %v1117 = vadd.f32 0.0, %v1116
      %v1118 = vpop.f32.mrb[0].mxu0
      %1119 = vmatprep.mubr.f32.mxu0 0.0
      %1120 = vmatmul.mubr.f32.gmra.mrb[0].mxu0 %v978
      %v1121 = vpop.f32.mrb[0].mxu0
      %v1122 = vadd.f32 0.0, %v1121
      %v1123 = vpop.f32.mrb[0].mxu0
      %1124 = vmatprep.mubr.f32.mxu0 0.0
      %1125 = vmatmul.mubr.f32.gmra.mrb[0].mxu0 %v981
      %v1126 = vpop.f32.mrb[0].mxu0
      %v1127 = vadd.f32 0.0, %v1126
      %v1128 = vpop.f32.mrb[0].mxu0
      %1129 = vdwg.mxu0
      %v1130 = vadd.f32 %v902, %v1052
      %v1131 = vadd.f32 %v903, %v1057
      %v1132 = vadd.f32 %v904, %v1062
      %v1133 = vadd.f32 %v905, %v1067
      %v1134 = vadd.f32 %v906, %v1072
      %v1135 = vadd.f32 %v907, %v1077
      %v1136 = vadd.f32 %v908, %v1082
      %v1137 = vadd.f32 %v909, %v1087
      %v1138 = vadd.f32 %v910, %v1092
      %v1139 = vadd.f32 %v911, %v1097
      %v1140 = vadd.f32 %v912, %v1102
      %v1141 = vadd.f32 %v913, %v1107
      %v1142 = vadd.f32 %v914, %v1112
      %v1143 = vadd.f32 %v915, %v1117
      %v1144 = vadd.f32 %v916, %v1122
      %v1145 = vadd.f32 %v917, %v1127
      %v1146 = vld [vmem:[%s246 + $0x1] sm:$0xff]
      %v1147 = vld [vmem:[%s246 + $0x9] sm:$0xff]
      %v1148 = vld [vmem:[%s246 + $0x19] sm:$0xff]
      %v1149 = vld [vmem:[%s246 + $0x21] sm:$0xff]
      %v1150 = vld [vmem:[%s246 + $0x31] sm:$0xff]
      %v1151 = vld [vmem:[%s246 + $0x39] sm:$0xff]
      %v1152 = vld [vmem:[%s246 + $0x49] sm:$0xff]
      %v1153 = vld [vmem:[%s246 + $0x51] sm:$0xff]
      %v1154 = vld [vmem:[%s246 + $0x61] sm:$0xff]
      %v1155 = vld [vmem:[%s246 + $0x69] sm:$0xff]
      %v1156 = vld [vmem:[%s246 + $0x79] sm:$0xff]
      %v1157 = vld [vmem:[%s246 + $0x81] sm:$0xff]
      %v1158 = vld [vmem:[%s246 + $0x91] sm:$0xff]
      %v1159 = vld [vmem:[%s246 + $0x99] sm:$0xff]
      %v1160 = vld [vmem:[%s246 + $0xa9] sm:$0xff]
      %v1161 = vld [vmem:[%s246 + $0xb1] sm:$0xff]
      %v1162 = vrot.slane %v263, 4
      %v1164 = vsel %vm198, %v1146, 0
      %v1167 = vsel %vm198, %v1147, 0
      %v1170 = vsel %vm198, %v1148, 0
      %v1173 = vsel %vm198, %v1149, 0
      %v1176 = vsel %vm198, %v1150, 0
      %v1179 = vsel %vm198, %v1151, 0
      %v1182 = vsel %vm198, %v1152, 0
      %v1185 = vsel %vm198, %v1153, 0
      %v1188 = vsel %vm198, %v1154, 0
      %v1191 = vsel %vm198, %v1155, 0
      %v1194 = vsel %vm198, %v1156, 0
      %v1197 = vsel %vm198, %v1157, 0
      %v1200 = vsel %vm198, %v1158, 0
      %v1203 = vsel %vm198, %v1159, 0
      %v1206 = vsel %vm198, %v1160, 0
      %v1209 = vsel %vm198, %v1161, 0
      %v1211 = vsel %vm347, %v1162, 0
      %1213 = vmatprep.subr.mxu0 0.0
      %1214 = vmatpush1.msra.mxu0 %v1211
      %1215 = vmatprep.subr.mxu0 0.0
      %1216 = vmatpush1.msra.mxu0 0.0
      %1217 = vmatprep.subr.mxu0 0.0
      %1218 = vmatpush1.msra.mxu0 0.0
      %1219 = vmatprep.subr.mxu0 0.0
      %1220 = vmatpush1.msra.mxu0 0.0
      %1221 = vmatprep.subr.mxu0 0.0
      %1222 = vmatpush1.msra.mxu0 0.0
      %1223 = vmatprep.subr.mxu0 0.0
      %1224 = vmatpush1.msra.mxu0 0.0
      %1225 = vmatprep.subr.mxu0 0.0
      %1226 = vmatpush1.msra.mxu0 0.0
      %1227 = vmatprep.subr.mxu0 0.0
      %1228 = vmatpush1.msra.mxu0 0.0
      %1229 = vmatprep.subr.mxu0 0.0
      %1230 = vmatpush1.msra.mxu0 0.0
      %1231 = vmatprep.subr.mxu0 0.0
      %1232 = vmatpush1.msra.mxu0 0.0
      %1233 = vmatprep.subr.mxu0 0.0
      %1234 = vmatpush1.msra.mxu0 0.0
      %1235 = vmatprep.subr.mxu0 0.0
      %1236 = vmatpush1.msra.mxu0 0.0
      %1237 = vmatprep.subr.mxu0 0.0
      %1238 = vmatpush1.msra.mxu0 0.0
      %1239 = vmatprep.subr.mxu0 0.0
      %1240 = vmatpush1.msra.mxu0 0.0
      %1241 = vmatprep.subr.mxu0 0.0
      %1242 = vmatpush1.msra.mxu0 0.0
      %1243 = vmatprep.subr.mxu0 0.0
      %1244 = vmatpush1.msra.mxu0 0.0
      %1245 = vmatprep.subr.mxu0 0.0
      %1246 = vmatpush1.msra.mxu0 0.0
      %1247 = vmatprep.subr.mxu0 0.0
      %1248 = vmatpush1.msra.mxu0 0.0
      %1249 = vmatprep.subr.mxu0 0.0
      %1250 = vmatpush1.msra.mxu0 0.0
      %1251 = vmatprep.subr.mxu0 0.0
      %1252 = vmatpush1.msra.mxu0 0.0
      %1253 = vmatprep.subr.mxu0 0.0
      %1254 = vmatpush1.msra.mxu0 0.0
      %1255 = vmatprep.subr.mxu0 0.0
      %1256 = vmatpush1.msra.mxu0 0.0
      %1257 = vmatprep.subr.mxu0 0.0
      %1258 = vmatpush1.msra.mxu0 0.0
      %1259 = vmatprep.subr.mxu0 0.0
      %1260 = vmatpush1.msra.mxu0 0.0
      %1261 = vmatprep.subr.mxu0 0.0
      %1262 = vmatpush1.msra.mxu0 0.0
      %1263 = vmatprep.subr.mxu0 0.0
      %1264 = vmatpush1.msra.mxu0 0.0
      %1265 = vmatprep.subr.mxu0 0.0
      %1266 = vmatpush1.msra.mxu0 0.0
      %1267 = vmatprep.subr.mxu0 0.0
      %1268 = vmatpush1.msra.mxu0 0.0
      %1269 = vmatprep.subr.mxu0 0.0
      %1270 = vmatpush1.msra.mxu0 0.0
      %1271 = vmatprep.subr.mxu0 0.0
      %1272 = vmatpush1.msra.mxu0 0.0
      %1273 = vmatprep.subr.mxu0 0.0
      %1274 = vmatpush1.msra.mxu0 0.0
      %1275 = vmatprep.subr.mxu0 0.0
      %1276 = vmatpush1.msra.mxu0 0.0
      %1277 = vmatprep.mubr.f32.mxu0 0.0
      %1278 = vmatmul.mubr.f32.gmra.mrb[0].mxu0 %v1164
      %v1279 = vpop.f32.mrb[0].mxu0
      %v1280 = vadd.f32 0.0, %v1279
      %v1281 = vpop.f32.mrb[0].mxu0
      %1282 = vmatprep.mubr.f32.mxu0 0.0
      %1283 = vmatmul.mubr.f32.gmra.mrb[0].mxu0 %v1167
      %v1284 = vpop.f32.mrb[0].mxu0
      %v1285 = vadd.f32 0.0, %v1284
      %v1286 = vpop.f32.mrb[0].mxu0
      %1287 = vmatprep.mubr.f32.mxu0 0.0
      %1288 = vmatmul.mubr.f32.gmra.mrb[0].mxu0 %v1170
      %v1289 = vpop.f32.mrb[0].mxu0
      %v1290 = vadd.f32 0.0, %v1289
      %v1291 = vpop.f32.mrb[0].mxu0
      %1292 = vmatprep.mubr.f32.mxu0 0.0
      %1293 = vmatmul.mubr.f32.gmra.mrb[0].mxu0 %v1173
      %v1294 = vpop.f32.mrb[0].mxu0
      %v1295 = vadd.f32 0.0, %v1294
      %v1296 = vpop.f32.mrb[0].mxu0
      %1297 = vmatprep.mubr.f32.mxu0 0.0
      %1298 = vmatmul.mubr.f32.gmra.mrb[0].mxu0 %v1176
      %v1299 = vpop.f32.mrb[0].mxu0
      %v1300 = vadd.f32 0.0, %v1299
      %v1301 = vpop.f32.mrb[0].mxu0
      %1302 = vmatprep.mubr.f32.mxu0 0.0
      %1303 = vmatmul.mubr.f32.gmra.mrb[0].mxu0 %v1179
      %v1304 = vpop.f32.mrb[0].mxu0
      %v1305 = vadd.f32 0.0, %v1304
      %v1306 = vpop.f32.mrb[0].mxu0
      %1307 = vmatprep.mubr.f32.mxu0 0.0
      %1308 = vmatmul.mubr.f32.gmra.mrb[0].mxu0 %v1182
      %v1309 = vpop.f32.mrb[0].mxu0
      %v1310 = vadd.f32 0.0, %v1309
      %v1311 = vpop.f32.mrb[0].mxu0
      %1312 = vmatprep.mubr.f32.mxu0 0.0
      %1313 = vmatmul.mubr.f32.gmra.mrb[0].mxu0 %v1185
      %v1314 = vpop.f32.mrb[0].mxu0
      %v1315 = vadd.f32 0.0, %v1314
      %v1316 = vpop.f32.mrb[0].mxu0
      %1317 = vmatprep.mubr.f32.mxu0 0.0
      %1318 = vmatmul.mubr.f32.gmra.mrb[0].mxu0 %v1188
      %v1319 = vpop.f32.mrb[0].mxu0
      %v1320 = vadd.f32 0.0, %v1319
      %v1321 = vpop.f32.mrb[0].mxu0
      %1322 = vmatprep.mubr.f32.mxu0 0.0
      %1323 = vmatmul.mubr.f32.gmra.mrb[0].mxu0 %v1191
      %v1324 = vpop.f32.mrb[0].mxu0
      %v1325 = vadd.f32 0.0, %v1324
      %v1326 = vpop.f32.mrb[0].mxu0
      %1327 = vmatprep.mubr.f32.mxu0 0.0
      %1328 = vmatmul.mubr.f32.gmra.mrb[0].mxu0 %v1194
      %v1329 = vpop.f32.mrb[0].mxu0
      %v1330 = vadd.f32 0.0, %v1329
      %v1331 = vpop.f32.mrb[0].mxu0
      %1332 = vmatprep.mubr.f32.mxu0 0.0
      %1333 = vmatmul.mubr.f32.gmra.mrb[0].mxu0 %v1197
      %v1334 = vpop.f32.mrb[0].mxu0
      %v1335 = vadd.f32 0.0, %v1334
      %v1336 = vpop.f32.mrb[0].mxu0
      %1337 = vmatprep.mubr.f32.mxu0 0.0
      %1338 = vmatmul.mubr.f32.gmra.mrb[0].mxu0 %v1200
      %v1339 = vpop.f32.mrb[0].mxu0
      %v1340 = vadd.f32 0.0, %v1339
      %v1341 = vpop.f32.mrb[0].mxu0
      %1342 = vmatprep.mubr.f32.mxu0 0.0
      %1343 = vmatmul.mubr.f32.gmra.mrb[0].mxu0 %v1203
      %v1344 = vpop.f32.mrb[0].mxu0
      %v1345 = vadd.f32 0.0, %v1344
      %v1346 = vpop.f32.mrb[0].mxu0
      %1347 = vmatprep.mubr.f32.mxu0 0.0
      %1348 = vmatmul.mubr.f32.gmra.mrb[0].mxu0 %v1206
      %v1349 = vpop.f32.mrb[0].mxu0
      %v1350 = vadd.f32 0.0, %v1349
      %v1351 = vpop.f32.mrb[0].mxu0
      %1352 = vmatprep.mubr.f32.mxu0 0.0
      %1353 = vmatmul.mubr.f32.gmra.mrb[0].mxu0 %v1209
      %v1354 = vpop.f32.mrb[0].mxu0
      %v1355 = vadd.f32 0.0, %v1354
      %v1356 = vpop.f32.mrb[0].mxu0
      %1357 = vdwg.mxu0
      %v1358 = vadd.f32 %v1130, %v1280
      %v1359 = vadd.f32 %v1131, %v1285
      %v1360 = vadd.f32 %v1132, %v1290
      %v1361 = vadd.f32 %v1133, %v1295
      %v1362 = vadd.f32 %v1134, %v1300
      %v1363 = vadd.f32 %v1135, %v1305
      %v1364 = vadd.f32 %v1136, %v1310
      %v1365 = vadd.f32 %v1137, %v1315
      %v1366 = vadd.f32 %v1138, %v1320
      %v1367 = vadd.f32 %v1139, %v1325
      %v1368 = vadd.f32 %v1140, %v1330
      %v1369 = vadd.f32 %v1141, %v1335
      %v1370 = vadd.f32 %v1142, %v1340
      %v1371 = vadd.f32 %v1143, %v1345
      %v1372 = vadd.f32 %v1144, %v1350
      %v1373 = vadd.f32 %v1145, %v1355
      %v1374 = vld [vmem:[%s246 + $0x2] sm:$0xff]
      %v1375 = vld [vmem:[%s246 + $0xa] sm:$0xff]
      %v1376 = vld [vmem:[%s246 + $0x1a] sm:$0xff]
      %v1377 = vld [vmem:[%s246 + $0x22] sm:$0xff]
      %v1378 = vld [vmem:[%s246 + $0x32] sm:$0xff]
      %v1379 = vld [vmem:[%s246 + $0x3a] sm:$0xff]
      %v1380 = vld [vmem:[%s246 + $0x4a] sm:$0xff]
      %v1381 = vld [vmem:[%s246 + $0x52] sm:$0xff]
      %v1382 = vld [vmem:[%s246 + $0x62] sm:$0xff]
      %v1383 = vld [vmem:[%s246 + $0x6a] sm:$0xff]
      %v1384 = vld [vmem:[%s246 + $0x7a] sm:$0xff]
      %v1385 = vld [vmem:[%s246 + $0x82] sm:$0xff]
      %v1386 = vld [vmem:[%s246 + $0x92] sm:$0xff]
      %v1387 = vld [vmem:[%s246 + $0x9a] sm:$0xff]
      %v1388 = vld [vmem:[%s246 + $0xaa] sm:$0xff]
      %v1389 = vld [vmem:[%s246 + $0xb2] sm:$0xff]
      %v1390 = vrot.slane %v263, 5
      %v1392 = vsel %vm198, %v1374, 0
      %v1395 = vsel %vm198, %v1375, 0
      %v1398 = vsel %vm198, %v1376, 0
      %v1401 = vsel %vm198, %v1377, 0
      %v1404 = vsel %vm198, %v1378, 0
      %v1407 = vsel %vm198, %v1379, 0
      %v1410 = vsel %vm198, %v1380, 0
      %v1413 = vsel %vm198, %v1381, 0
      %v1416 = vsel %vm198, %v1382, 0
      %v1419 = vsel %vm198, %v1383, 0
      %v1422 = vsel %vm198, %v1384, 0
      %v1425 = vsel %vm198, %v1385, 0
      %v1428 = vsel %vm198, %v1386, 0
      %v1431 = vsel %vm198, %v1387, 0
      %v1434 = vsel %vm198, %v1388, 0
      %v1437 = vsel %vm198, %v1389, 0
      %v1439 = vsel %vm347, %v1390, 0
      %1441 = vmatprep.subr.mxu0 0.0
      %1442 = vmatpush1.msra.mxu0 %v1439
      %1443 = vmatprep.subr.mxu0 0.0
      %1444 = vmatpush1.msra.mxu0 0.0
      %1445 = vmatprep.subr.mxu0 0.0
      %1446 = vmatpush1.msra.mxu0 0.0
      %1447 = vmatprep.subr.mxu0 0.0
      %1448 = vmatpush1.msra.mxu0 0.0
      %1449 = vmatprep.subr.mxu0 0.0
      %1450 = vmatpush1.msra.mxu0 0.0
      %1451 = vmatprep.subr.mxu0 0.0
      %1452 = vmatpush1.msra.mxu0 0.0
      %1453 = vmatprep.subr.mxu0 0.0
      %1454 = vmatpush1.msra.mxu0 0.0
      %1455 = vmatprep.subr.mxu0 0.0
      %1456 = vmatpush1.msra.mxu0 0.0
      %1457 = vmatprep.subr.mxu0 0.0
      %1458 = vmatpush1.msra.mxu0 0.0
      %1459 = vmatprep.subr.mxu0 0.0
      %1460 = vmatpush1.msra.mxu0 0.0
      %1461 = vmatprep.subr.mxu0 0.0
      %1462 = vmatpush1.msra.mxu0 0.0
      %1463 = vmatprep.subr.mxu0 0.0
      %1464 = vmatpush1.msra.mxu0 0.0
      %1465 = vmatprep.subr.mxu0 0.0
      %1466 = vmatpush1.msra.mxu0 0.0
      %1467 = vmatprep.subr.mxu0 0.0
      %1468 = vmatpush1.msra.mxu0 0.0
      %1469 = vmatprep.subr.mxu0 0.0
      %1470 = vmatpush1.msra.mxu0 0.0
      %1471 = vmatprep.subr.mxu0 0.0
      %1472 = vmatpush1.msra.mxu0 0.0
      %1473 = vmatprep.subr.mxu0 0.0
      %1474 = vmatpush1.msra.mxu0 0.0
      %1475 = vmatprep.subr.mxu0 0.0
      %1476 = vmatpush1.msra.mxu0 0.0
      %1477 = vmatprep.subr.mxu0 0.0
      %1478 = vmatpush1.msra.mxu0 0.0
      %1479 = vmatprep.subr.mxu0 0.0
      %1480 = vmatpush1.msra.mxu0 0.0
      %1481 = vmatprep.subr.mxu0 0.0
      %1482 = vmatpush1.msra.mxu0 0.0
      %1483 = vmatprep.subr.mxu0 0.0
      %1484 = vmatpush1.msra.mxu0 0.0
      %1485 = vmatprep.subr.mxu0 0.0
      %1486 = vmatpush1.msra.mxu0 0.0
      %1487 = vmatprep.subr.mxu0 0.0
      %1488 = vmatpush1.msra.mxu0 0.0
      %1489 = vmatprep.subr.mxu0 0.0
      %1490 = vmatpush1.msra.mxu0 0.0
      %1491 = vmatprep.subr.mxu0 0.0
      %1492 = vmatpush1.msra.mxu0 0.0
      %1493 = vmatprep.subr.mxu0 0.0
      %1494 = vmatpush1.msra.mxu0 0.0
      %1495 = vmatprep.subr.mxu0 0.0
      %1496 = vmatpush1.msra.mxu0 0.0
      %1497 = vmatprep.subr.mxu0 0.0
      %1498 = vmatpush1.msra.mxu0 0.0
      %1499 = vmatprep.subr.mxu0 0.0
      %1500 = vmatpush1.msra.mxu0 0.0
      %1501 = vmatprep.subr.mxu0 0.0
      %1502 = vmatpush1.msra.mxu0 0.0
      %1503 = vmatprep.subr.mxu0 0.0
      %1504 = vmatpush1.msra.mxu0 0.0
      %1505 = vmatprep.mubr.f32.mxu0 0.0
      %1506 = vmatmul.mubr.f32.gmra.mrb[0].mxu0 %v1392
      %v1507 = vpop.f32.mrb[0].mxu0
      %v1508 = vadd.f32 0.0, %v1507
      %v1509 = vpop.f32.mrb[0].mxu0
      %1510 = vmatprep.mubr.f32.mxu0 0.0
      %1511 = vmatmul.mubr.f32.gmra.mrb[0].mxu0 %v1395
      %v1512 = vpop.f32.mrb[0].mxu0
      %v1513 = vadd.f32 0.0, %v1512
      %v1514 = vpop.f32.mrb[0].mxu0
      %1515 = vmatprep.mubr.f32.mxu0 0.0
      %1516 = vmatmul.mubr.f32.gmra.mrb[0].mxu0 %v1398
      %v1517 = vpop.f32.mrb[0].mxu0
      %v1518 = vadd.f32 0.0, %v1517
      %v1519 = vpop.f32.mrb[0].mxu0
      %1520 = vmatprep.mubr.f32.mxu0 0.0
      %1521 = vmatmul.mubr.f32.gmra.mrb[0].mxu0 %v1401
      %v1522 = vpop.f32.mrb[0].mxu0
      %v1523 = vadd.f32 0.0, %v1522
      %v1524 = vpop.f32.mrb[0].mxu0
      %1525 = vmatprep.mubr.f32.mxu0 0.0
      %1526 = vmatmul.mubr.f32.gmra.mrb[0].mxu0 %v1404
      %v1527 = vpop.f32.mrb[0].mxu0
      %v1528 = vadd.f32 0.0, %v1527
      %v1529 = vpop.f32.mrb[0].mxu0
      %1530 = vmatprep.mubr.f32.mxu0 0.0
      %1531 = vmatmul.mubr.f32.gmra.mrb[0].mxu0 %v1407
      %v1532 = vpop.f32.mrb[0].mxu0
      %v1533 = vadd.f32 0.0, %v1532
      %v1534 = vpop.f32.mrb[0].mxu0
      %1535 = vmatprep.mubr.f32.mxu0 0.0
      %1536 = vmatmul.mubr.f32.gmra.mrb[0].mxu0 %v1410
      %v1537 = vpop.f32.mrb[0].mxu0
      %v1538 = vadd.f32 0.0, %v1537
      %v1539 = vpop.f32.mrb[0].mxu0
      %1540 = vmatprep.mubr.f32.mxu0 0.0
      %1541 = vmatmul.mubr.f32.gmra.mrb[0].mxu0 %v1413
      %v1542 = vpop.f32.mrb[0].mxu0
      %v1543 = vadd.f32 0.0, %v1542
      %v1544 = vpop.f32.mrb[0].mxu0
      %1545 = vmatprep.mubr.f32.mxu0 0.0
      %1546 = vmatmul.mubr.f32.gmra.mrb[0].mxu0 %v1416
      %v1547 = vpop.f32.mrb[0].mxu0
      %v1548 = vadd.f32 0.0, %v1547
      %v1549 = vpop.f32.mrb[0].mxu0
      %1550 = vmatprep.mubr.f32.mxu0 0.0
      %1551 = vmatmul.mubr.f32.gmra.mrb[0].mxu0 %v1419
      %v1552 = vpop.f32.mrb[0].mxu0
      %v1553 = vadd.f32 0.0, %v1552
      %v1554 = vpop.f32.mrb[0].mxu0
      %1555 = vmatprep.mubr.f32.mxu0 0.0
      %1556 = vmatmul.mubr.f32.gmra.mrb[0].mxu0 %v1422
      %v1557 = vpop.f32.mrb[0].mxu0
      %v1558 = vadd.f32 0.0, %v1557
      %v1559 = vpop.f32.mrb[0].mxu0
      %1560 = vmatprep.mubr.f32.mxu0 0.0
      %1561 = vmatmul.mubr.f32.gmra.mrb[0].mxu0 %v1425
      %v1562 = vpop.f32.mrb[0].mxu0
      %v1563 = vadd.f32 0.0, %v1562
      %v1564 = vpop.f32.mrb[0].mxu0
      %1565 = vmatprep.mubr.f32.mxu0 0.0
      %1566 = vmatmul.mubr.f32.gmra.mrb[0].mxu0 %v1428
      %v1567 = vpop.f32.mrb[0].mxu0
      %v1568 = vadd.f32 0.0, %v1567
      %v1569 = vpop.f32.mrb[0].mxu0
      %1570 = vmatprep.mubr.f32.mxu0 0.0
      %1571 = vmatmul.mubr.f32.gmra.mrb[0].mxu0 %v1431
      %v1572 = vpop.f32.mrb[0].mxu0
      %v1573 = vadd.f32 0.0, %v1572
      %v1574 = vpop.f32.mrb[0].mxu0
      %1575 = vmatprep.mubr.f32.mxu0 0.0
      %1576 = vmatmul.mubr.f32.gmra.mrb[0].mxu0 %v1434
      %v1577 = vpop.f32.mrb[0].mxu0
      %v1578 = vadd.f32 0.0, %v1577
      %v1579 = vpop.f32.mrb[0].mxu0
      %1580 = vmatprep.mubr.f32.mxu0 0.0
      %1581 = vmatmul.mubr.f32.gmra.mrb[0].mxu0 %v1437
      %v1582 = vpop.f32.mrb[0].mxu0
      %v1583 = vadd.f32 0.0, %v1582
      %v1584 = vpop.f32.mrb[0].mxu0
      %1585 = vdwg.mxu0
      %v1586 = vadd.f32 %v1358, %v1508
      %v1587 = vadd.f32 %v1359, %v1513
      %v1588 = vadd.f32 %v1360, %v1518
      %v1589 = vadd.f32 %v1361, %v1523
      %v1590 = vadd.f32 %v1362, %v1528
      %v1591 = vadd.f32 %v1363, %v1533
      %v1592 = vadd.f32 %v1364, %v1538
      %v1593 = vadd.f32 %v1365, %v1543
      %v1594 = vadd.f32 %v1366, %v1548
      %v1595 = vadd.f32 %v1367, %v1553
      %v1596 = vadd.f32 %v1368, %v1558
      %v1597 = vadd.f32 %v1369, %v1563
      %v1598 = vadd.f32 %v1370, %v1568
      %v1599 = vadd.f32 %v1371, %v1573
      %v1600 = vadd.f32 %v1372, %v1578
      %v1601 = vadd.f32 %v1373, %v1583
      %s1602 = scalar_lea.vmem [#allocation2], 48
      %v1603 = vld [vmem:[%s1602] sm:$0xff]
      %v1604 = vld [vmem:[%s1602 + $0x8] sm:$0xff]
      %v1605 = vld [vmem:[%s1602 + $0x18] sm:$0xff]
      %v1606 = vld [vmem:[%s1602 + $0x20] sm:$0xff]
      %v1607 = vld [vmem:[%s1602 + $0x30] sm:$0xff]
      %v1608 = vld [vmem:[%s1602 + $0x38] sm:$0xff]
      %v1609 = vld [vmem:[%s1602 + $0x48] sm:$0xff]
      %v1610 = vld [vmem:[%s1602 + $0x50] sm:$0xff]
      %v1611 = vld [vmem:[%s1602 + $0x60] sm:$0xff]
      %v1612 = vld [vmem:[%s1602 + $0x68] sm:$0xff]
      %v1613 = vld [vmem:[%s1602 + $0x78] sm:$0xff]
      %v1614 = vld [vmem:[%s1602 + $0x80] sm:$0xff]
      %v1615 = vld [vmem:[%s1602 + $0x90] sm:$0xff]
      %v1616 = vld [vmem:[%s1602 + $0x98] sm:$0xff]
      %v1617 = vld [vmem:[%s1602 + $0xa8] sm:$0xff]
      %v1618 = vld [vmem:[%s1602 + $0xb0] sm:$0xff]
      %v1619 = vrot.slane %v263, 6
      %v1621 = vsel %vm198, %v1603, 0
      %v1624 = vsel %vm198, %v1604, 0
      %v1627 = vsel %vm198, %v1605, 0
      %v1630 = vsel %vm198, %v1606, 0
      %v1633 = vsel %vm198, %v1607, 0
      %v1636 = vsel %vm198, %v1608, 0
      %v1639 = vsel %vm198, %v1609, 0
      %v1642 = vsel %vm198, %v1610, 0
      %v1645 = vsel %vm198, %v1611, 0
      %v1648 = vsel %vm198, %v1612, 0
      %v1651 = vsel %vm198, %v1613, 0
      %v1654 = vsel %vm198, %v1614, 0
      %v1657 = vsel %vm198, %v1615, 0
      %v1660 = vsel %vm198, %v1616, 0
      %v1663 = vsel %vm198, %v1617, 0
      %v1666 = vsel %vm198, %v1618, 0
      %v1668 = vsel %vm347, %v1619, 0
      %1670 = vmatprep.subr.mxu0 0.0
      %1671 = vmatpush1.msra.mxu0 %v1668
      %1672 = vmatprep.subr.mxu0 0.0
      %1673 = vmatpush1.msra.mxu0 0.0
      %1674 = vmatprep.subr.mxu0 0.0
      %1675 = vmatpush1.msra.mxu0 0.0
      %1676 = vmatprep.subr.mxu0 0.0
      %1677 = vmatpush1.msra.mxu0 0.0
      %1678 = vmatprep.subr.mxu0 0.0
      %1679 = vmatpush1.msra.mxu0 0.0
      %1680 = vmatprep.subr.mxu0 0.0
      %1681 = vmatpush1.msra.mxu0 0.0
      %1682 = vmatprep.subr.mxu0 0.0
      %1683 = vmatpush1.msra.mxu0 0.0
      %1684 = vmatprep.subr.mxu0 0.0
      %1685 = vmatpush1.msra.mxu0 0.0
      %1686 = vmatprep.subr.mxu0 0.0
      %1687 = vmatpush1.msra.mxu0 0.0
      %1688 = vmatprep.subr.mxu0 0.0
      %1689 = vmatpush1.msra.mxu0 0.0
      %1690 = vmatprep.subr.mxu0 0.0
      %1691 = vmatpush1.msra.mxu0 0.0
      %1692 = vmatprep.subr.mxu0 0.0
      %1693 = vmatpush1.msra.mxu0 0.0
      %1694 = vmatprep.subr.mxu0 0.0
      %1695 = vmatpush1.msra.mxu0 0.0
      %1696 = vmatprep.subr.mxu0 0.0
      %1697 = vmatpush1.msra.mxu0 0.0
      %1698 = vmatprep.subr.mxu0 0.0
      %1699 = vmatpush1.msra.mxu0 0.0
      %1700 = vmatprep.subr.mxu0 0.0
      %1701 = vmatpush1.msra.mxu0 0.0
      %1702 = vmatprep.subr.mxu0 0.0
      %1703 = vmatpush1.msra.mxu0 0.0
      %1704 = vmatprep.subr.mxu0 0.0
      %1705 = vmatpush1.msra.mxu0 0.0
      %1706 = vmatprep.subr.mxu0 0.0
      %1707 = vmatpush1.msra.mxu0 0.0
      %1708 = vmatprep.subr.mxu0 0.0
      %1709 = vmatpush1.msra.mxu0 0.0
      %1710 = vmatprep.subr.mxu0 0.0
      %1711 = vmatpush1.msra.mxu0 0.0
      %1712 = vmatprep.subr.mxu0 0.0
      %1713 = vmatpush1.msra.mxu0 0.0
      %1714 = vmatprep.subr.mxu0 0.0
      %1715 = vmatpush1.msra.mxu0 0.0
      %1716 = vmatprep.subr.mxu0 0.0
      %1717 = vmatpush1.msra.mxu0 0.0
      %1718 = vmatprep.subr.mxu0 0.0
      %1719 = vmatpush1.msra.mxu0 0.0
      %1720 = vmatprep.subr.mxu0 0.0
      %1721 = vmatpush1.msra.mxu0 0.0
      %1722 = vmatprep.subr.mxu0 0.0
      %1723 = vmatpush1.msra.mxu0 0.0
      %1724 = vmatprep.subr.mxu0 0.0
      %1725 = vmatpush1.msra.mxu0 0.0
      %1726 = vmatprep.subr.mxu0 0.0
      %1727 = vmatpush1.msra.mxu0 0.0
      %1728 = vmatprep.subr.mxu0 0.0
      %1729 = vmatpush1.msra.mxu0 0.0
      %1730 = vmatprep.subr.mxu0 0.0
      %1731 = vmatpush1.msra.mxu0 0.0
      %1732 = vmatprep.subr.mxu0 0.0
      %1733 = vmatpush1.msra.mxu0 0.0
      %1734 = vmatprep.mubr.f32.mxu0 0.0
      %1735 = vmatmul.mubr.f32.gmra.mrb[0].mxu0 %v1621
      %v1736 = vpop.f32.mrb[0].mxu0
      %v1737 = vadd.f32 0.0, %v1736
      %v1738 = vpop.f32.mrb[0].mxu0
      %1739 = vmatprep.mubr.f32.mxu0 0.0
      %1740 = vmatmul.mubr.f32.gmra.mrb[0].mxu0 %v1624
      %v1741 = vpop.f32.mrb[0].mxu0
      %v1742 = vadd.f32 0.0, %v1741
      %v1743 = vpop.f32.mrb[0].mxu0
      %1744 = vmatprep.mubr.f32.mxu0 0.0
      %1745 = vmatmul.mubr.f32.gmra.mrb[0].mxu0 %v1627
      %v1746 = vpop.f32.mrb[0].mxu0
      %v1747 = vadd.f32 0.0, %v1746
      %v1748 = vpop.f32.mrb[0].mxu0
      %1749 = vmatprep.mubr.f32.mxu0 0.0
      %1750 = vmatmul.mubr.f32.gmra.mrb[0].mxu0 %v1630
      %v1751 = vpop.f32.mrb[0].mxu0
      %v1752 = vadd.f32 0.0, %v1751
      %v1753 = vpop.f32.mrb[0].mxu0
      %1754 = vmatprep.mubr.f32.mxu0 0.0
      %1755 = vmatmul.mubr.f32.gmra.mrb[0].mxu0 %v1633
      %v1756 = vpop.f32.mrb[0].mxu0
      %v1757 = vadd.f32 0.0, %v1756
      %v1758 = vpop.f32.mrb[0].mxu0
      %1759 = vmatprep.mubr.f32.mxu0 0.0
      %1760 = vmatmul.mubr.f32.gmra.mrb[0].mxu0 %v1636
      %v1761 = vpop.f32.mrb[0].mxu0
      %v1762 = vadd.f32 0.0, %v1761
      %v1763 = vpop.f32.mrb[0].mxu0
      %1764 = vmatprep.mubr.f32.mxu0 0.0
      %1765 = vmatmul.mubr.f32.gmra.mrb[0].mxu0 %v1639
      %v1766 = vpop.f32.mrb[0].mxu0
      %v1767 = vadd.f32 0.0, %v1766
      %v1768 = vpop.f32.mrb[0].mxu0
      %1769 = vmatprep.mubr.f32.mxu0 0.0
      %1770 = vmatmul.mubr.f32.gmra.mrb[0].mxu0 %v1642
      %v1771 = vpop.f32.mrb[0].mxu0
      %v1772 = vadd.f32 0.0, %v1771
      %v1773 = vpop.f32.mrb[0].mxu0
      %1774 = vmatprep.mubr.f32.mxu0 0.0
      %1775 = vmatmul.mubr.f32.gmra.mrb[0].mxu0 %v1645
      %v1776 = vpop.f32.mrb[0].mxu0
      %v1777 = vadd.f32 0.0, %v1776
      %v1778 = vpop.f32.mrb[0].mxu0
      %1779 = vmatprep.mubr.f32.mxu0 0.0
      %1780 = vmatmul.mubr.f32.gmra.mrb[0].mxu0 %v1648
      %v1781 = vpop.f32.mrb[0].mxu0
      %v1782 = vadd.f32 0.0, %v1781
      %v1783 = vpop.f32.mrb[0].mxu0
      %1784 = vmatprep.mubr.f32.mxu0 0.0
      %1785 = vmatmul.mubr.f32.gmra.mrb[0].mxu0 %v1651
      %v1786 = vpop.f32.mrb[0].mxu0
      %v1787 = vadd.f32 0.0, %v1786
      %v1788 = vpop.f32.mrb[0].mxu0
      %1789 = vmatprep.mubr.f32.mxu0 0.0
      %1790 = vmatmul.mubr.f32.gmra.mrb[0].mxu0 %v1654
      %v1791 = vpop.f32.mrb[0].mxu0
      %v1792 = vadd.f32 0.0, %v1791
      %v1793 = vpop.f32.mrb[0].mxu0
      %1794 = vmatprep.mubr.f32.mxu0 0.0
      %1795 = vmatmul.mubr.f32.gmra.mrb[0].mxu0 %v1657
      %v1796 = vpop.f32.mrb[0].mxu0
      %v1797 = vadd.f32 0.0, %v1796
      %v1798 = vpop.f32.mrb[0].mxu0
      %1799 = vmatprep.mubr.f32.mxu0 0.0
      %1800 = vmatmul.mubr.f32.gmra.mrb[0].mxu0 %v1660
      %v1801 = vpop.f32.mrb[0].mxu0
      %v1802 = vadd.f32 0.0, %v1801
      %v1803 = vpop.f32.mrb[0].mxu0
      %1804 = vmatprep.mubr.f32.mxu0 0.0
      %1805 = vmatmul.mubr.f32.gmra.mrb[0].mxu0 %v1663
      %v1806 = vpop.f32.mrb[0].mxu0
      %v1807 = vadd.f32 0.0, %v1806
      %v1808 = vpop.f32.mrb[0].mxu0
      %1809 = vmatprep.mubr.f32.mxu0 0.0
      %1810 = vmatmul.mubr.f32.gmra.mrb[0].mxu0 %v1666
      %v1811 = vpop.f32.mrb[0].mxu0
      %v1812 = vadd.f32 0.0, %v1811
      %v1813 = vpop.f32.mrb[0].mxu0
      %1814 = vdwg.mxu0
      %v1815 = vadd.f32 %v1586, %v1737
      %v1816 = vadd.f32 %v1587, %v1742
      %v1817 = vadd.f32 %v1588, %v1747
      %v1818 = vadd.f32 %v1589, %v1752
      %v1819 = vadd.f32 %v1590, %v1757
      %v1820 = vadd.f32 %v1591, %v1762
      %v1821 = vadd.f32 %v1592, %v1767
      %v1822 = vadd.f32 %v1593, %v1772
      %v1823 = vadd.f32 %v1594, %v1777
      %v1824 = vadd.f32 %v1595, %v1782
      %v1825 = vadd.f32 %v1596, %v1787
      %v1826 = vadd.f32 %v1597, %v1792
      %v1827 = vadd.f32 %v1598, %v1797
      %v1828 = vadd.f32 %v1599, %v1802
      %v1829 = vadd.f32 %v1600, %v1807
      %v1830 = vadd.f32 %v1601, %v1812
      %v1831 = vld [vmem:[%s1602 + $0x1] sm:$0xff]
      %v1832 = vld [vmem:[%s1602 + $0x9] sm:$0xff]
      %v1833 = vld [vmem:[%s1602 + $0x19] sm:$0xff]
      %v1834 = vld [vmem:[%s1602 + $0x21] sm:$0xff]
      %v1835 = vld [vmem:[%s1602 + $0x31] sm:$0xff]
      %v1836 = vld [vmem:[%s1602 + $0x39] sm:$0xff]
      %v1837 = vld [vmem:[%s1602 + $0x49] sm:$0xff]
      %v1838 = vld [vmem:[%s1602 + $0x51] sm:$0xff]
      %v1839 = vld [vmem:[%s1602 + $0x61] sm:$0xff]
      %v1840 = vld [vmem:[%s1602 + $0x69] sm:$0xff]
      %v1841 = vld [vmem:[%s1602 + $0x79] sm:$0xff]
      %v1842 = vld [vmem:[%s1602 + $0x81] sm:$0xff]
      %v1843 = vld [vmem:[%s1602 + $0x91] sm:$0xff]
      %v1844 = vld [vmem:[%s1602 + $0x99] sm:$0xff]
      %v1845 = vld [vmem:[%s1602 + $0xa9] sm:$0xff]
      %v1846 = vld [vmem:[%s1602 + $0xb1] sm:$0xff]
      %v1847 = vrot.slane %v263, 7
      %v1849 = vsel %vm198, %v1831, 0
      %v1852 = vsel %vm198, %v1832, 0
      %v1855 = vsel %vm198, %v1833, 0
      %v1858 = vsel %vm198, %v1834, 0
      %v1861 = vsel %vm198, %v1835, 0
      %v1864 = vsel %vm198, %v1836, 0
      %v1867 = vsel %vm198, %v1837, 0
      %v1870 = vsel %vm198, %v1838, 0
      %v1873 = vsel %vm198, %v1839, 0
      %v1876 = vsel %vm198, %v1840, 0
      %v1879 = vsel %vm198, %v1841, 0
      %v1882 = vsel %vm198, %v1842, 0
      %v1885 = vsel %vm198, %v1843, 0
      %v1888 = vsel %vm198, %v1844, 0
      %v1891 = vsel %vm198, %v1845, 0
      %v1894 = vsel %vm198, %v1846, 0
      %v1896 = vsel %vm347, %v1847, 0
      %1898 = vmatprep.subr.mxu0 0.0
      %1899 = vmatpush1.msra.mxu0 %v1896
      %1900 = vmatprep.subr.mxu0 0.0
      %1901 = vmatpush1.msra.mxu0 0.0
      %1902 = vmatprep.subr.mxu0 0.0
      %1903 = vmatpush1.msra.mxu0 0.0
      %1904 = vmatprep.subr.mxu0 0.0
      %1905 = vmatpush1.msra.mxu0 0.0
      %1906 = vmatprep.subr.mxu0 0.0
      %1907 = vmatpush1.msra.mxu0 0.0
      %1908 = vmatprep.subr.mxu0 0.0
      %1909 = vmatpush1.msra.mxu0 0.0
      %1910 = vmatprep.subr.mxu0 0.0
      %1911 = vmatpush1.msra.mxu0 0.0
      %1912 = vmatprep.subr.mxu0 0.0
      %1913 = vmatpush1.msra.mxu0 0.0
      %1914 = vmatprep.subr.mxu0 0.0
      %1915 = vmatpush1.msra.mxu0 0.0
      %1916 = vmatprep.subr.mxu0 0.0
      %1917 = vmatpush1.msra.mxu0 0.0
      %1918 = vmatprep.subr.mxu0 0.0
      %1919 = vmatpush1.msra.mxu0 0.0
      %1920 = vmatprep.subr.mxu0 0.0
      %1921 = vmatpush1.msra.mxu0 0.0
      %1922 = vmatprep.subr.mxu0 0.0
      %1923 = vmatpush1.msra.mxu0 0.0
      %1924 = vmatprep.subr.mxu0 0.0
      %1925 = vmatpush1.msra.mxu0 0.0
      %1926 = vmatprep.subr.mxu0 0.0
      %1927 = vmatpush1.msra.mxu0 0.0
      %1928 = vmatprep.subr.mxu0 0.0
      %1929 = vmatpush1.msra.mxu0 0.0
      %1930 = vmatprep.subr.mxu0 0.0
      %1931 = vmatpush1.msra.mxu0 0.0
      %1932 = vmatprep.subr.mxu0 0.0
      %1933 = vmatpush1.msra.mxu0 0.0
      %1934 = vmatprep.subr.mxu0 0.0
      %1935 = vmatpush1.msra.mxu0 0.0
      %1936 = vmatprep.subr.mxu0 0.0
      %1937 = vmatpush1.msra.mxu0 0.0
      %1938 = vmatprep.subr.mxu0 0.0
      %1939 = vmatpush1.msra.mxu0 0.0
      %1940 = vmatprep.subr.mxu0 0.0
      %1941 = vmatpush1.msra.mxu0 0.0
      %1942 = vmatprep.subr.mxu0 0.0
      %1943 = vmatpush1.msra.mxu0 0.0
      %1944 = vmatprep.subr.mxu0 0.0
      %1945 = vmatpush1.msra.mxu0 0.0
      %1946 = vmatprep.subr.mxu0 0.0
      %1947 = vmatpush1.msra.mxu0 0.0
      %1948 = vmatprep.subr.mxu0 0.0
      %1949 = vmatpush1.msra.mxu0 0.0
      %1950 = vmatprep.subr.mxu0 0.0
      %1951 = vmatpush1.msra.mxu0 0.0
      %1952 = vmatprep.subr.mxu0 0.0
      %1953 = vmatpush1.msra.mxu0 0.0
      %1954 = vmatprep.subr.mxu0 0.0
      %1955 = vmatpush1.msra.mxu0 0.0
      %1956 = vmatprep.subr.mxu0 0.0
      %1957 = vmatpush1.msra.mxu0 0.0
      %1958 = vmatprep.subr.mxu0 0.0
      %1959 = vmatpush1.msra.mxu0 0.0
      %1960 = vmatprep.subr.mxu0 0.0
      %1961 = vmatpush1.msra.mxu0 0.0
      %1962 = vmatprep.mubr.f32.mxu0 0.0
      %1963 = vmatmul.mubr.f32.gmra.mrb[0].mxu0 %v1849
      %v1964 = vpop.f32.mrb[0].mxu0
      %v1965 = vadd.f32 0.0, %v1964
      %v1966 = vpop.f32.mrb[0].mxu0
      %1967 = vmatprep.mubr.f32.mxu0 0.0
      %1968 = vmatmul.mubr.f32.gmra.mrb[0].mxu0 %v1852
      %v1969 = vpop.f32.mrb[0].mxu0
      %v1970 = vadd.f32 0.0, %v1969
      %v1971 = vpop.f32.mrb[0].mxu0
      %1972 = vmatprep.mubr.f32.mxu0 0.0
      %1973 = vmatmul.mubr.f32.gmra.mrb[0].mxu0 %v1855
      %v1974 = vpop.f32.mrb[0].mxu0
      %v1975 = vadd.f32 0.0, %v1974
      %v1976 = vpop.f32.mrb[0].mxu0
      %1977 = vmatprep.mubr.f32.mxu0 0.0
      %1978 = vmatmul.mubr.f32.gmra.mrb[0].mxu0 %v1858
      %v1979 = vpop.f32.mrb[0].mxu0
      %v1980 = vadd.f32 0.0, %v1979
      %v1981 = vpop.f32.mrb[0].mxu0
      %1982 = vmatprep.mubr.f32.mxu0 0.0
      %1983 = vmatmul.mubr.f32.gmra.mrb[0].mxu0 %v1861
      %v1984 = vpop.f32.mrb[0].mxu0
      %v1985 = vadd.f32 0.0, %v1984
      %v1986 = vpop.f32.mrb[0].mxu0
      %1987 = vmatprep.mubr.f32.mxu0 0.0
      %1988 = vmatmul.mubr.f32.gmra.mrb[0].mxu0 %v1864
      %v1989 = vpop.f32.mrb[0].mxu0
      %v1990 = vadd.f32 0.0, %v1989
      %v1991 = vpop.f32.mrb[0].mxu0
      %1992 = vmatprep.mubr.f32.mxu0 0.0
      %1993 = vmatmul.mubr.f32.gmra.mrb[0].mxu0 %v1867
      %v1994 = vpop.f32.mrb[0].mxu0
      %v1995 = vadd.f32 0.0, %v1994
      %v1996 = vpop.f32.mrb[0].mxu0
      %1997 = vmatprep.mubr.f32.mxu0 0.0
      %1998 = vmatmul.mubr.f32.gmra.mrb[0].mxu0 %v1870
      %v1999 = vpop.f32.mrb[0].mxu0
      %v2000 = vadd.f32 0.0, %v1999
      %v2001 = vpop.f32.mrb[0].mxu0
      %2002 = vmatprep.mubr.f32.mxu0 0.0
      %2003 = vmatmul.mubr.f32.gmra.mrb[0].mxu0 %v1873
      %v2004 = vpop.f32.mrb[0].mxu0
      %v2005 = vadd.f32 0.0, %v2004
      %v2006 = vpop.f32.mrb[0].mxu0
      %2007 = vmatprep.mubr.f32.mxu0 0.0
      %2008 = vmatmul.mubr.f32.gmra.mrb[0].mxu0 %v1876
      %v2009 = vpop.f32.mrb[0].mxu0
      %v2010 = vadd.f32 0.0, %v2009
      %v2011 = vpop.f32.mrb[0].mxu0
      %2012 = vmatprep.mubr.f32.mxu0 0.0
      %2013 = vmatmul.mubr.f32.gmra.mrb[0].mxu0 %v1879
      %v2014 = vpop.f32.mrb[0].mxu0
      %v2015 = vadd.f32 0.0, %v2014
      %v2016 = vpop.f32.mrb[0].mxu0
      %2017 = vmatprep.mubr.f32.mxu0 0.0
      %2018 = vmatmul.mubr.f32.gmra.mrb[0].mxu0 %v1882
      %v2019 = vpop.f32.mrb[0].mxu0
      %v2020 = vadd.f32 0.0, %v2019
      %v2021 = vpop.f32.mrb[0].mxu0
      %2022 = vmatprep.mubr.f32.mxu0 0.0
      %2023 = vmatmul.mubr.f32.gmra.mrb[0].mxu0 %v1885
      %v2024 = vpop.f32.mrb[0].mxu0
      %v2025 = vadd.f32 0.0, %v2024
      %v2026 = vpop.f32.mrb[0].mxu0
      %2027 = vmatprep.mubr.f32.mxu0 0.0
      %2028 = vmatmul.mubr.f32.gmra.mrb[0].mxu0 %v1888
      %v2029 = vpop.f32.mrb[0].mxu0
      %v2030 = vadd.f32 0.0, %v2029
      %v2031 = vpop.f32.mrb[0].mxu0
      %2032 = vmatprep.mubr.f32.mxu0 0.0
      %2033 = vmatmul.mubr.f32.gmra.mrb[0].mxu0 %v1891
      %v2034 = vpop.f32.mrb[0].mxu0
      %v2035 = vadd.f32 0.0, %v2034
      %v2036 = vpop.f32.mrb[0].mxu0
      %2037 = vmatprep.mubr.f32.mxu0 0.0
      %2038 = vmatmul.mubr.f32.gmra.mrb[0].mxu0 %v1894
      %v2039 = vpop.f32.mrb[0].mxu0
      %v2040 = vadd.f32 0.0, %v2039
      %v2041 = vpop.f32.mrb[0].mxu0
      %2042 = vdwg.mxu0
      %v2043 = vadd.f32 %v1815, %v1965
      %v2044 = vadd.f32 %v1816, %v1970
      %v2045 = vadd.f32 %v1817, %v1975
      %v2046 = vadd.f32 %v1818, %v1980
      %v2047 = vadd.f32 %v1819, %v1985
      %v2048 = vadd.f32 %v1820, %v1990
      %v2049 = vadd.f32 %v1821, %v1995
      %v2050 = vadd.f32 %v1822, %v2000
      %v2051 = vadd.f32 %v1823, %v2005
      %v2052 = vadd.f32 %v1824, %v2010
      %v2053 = vadd.f32 %v1825, %v2015
      %v2054 = vadd.f32 %v1826, %v2020
      %v2055 = vadd.f32 %v1827, %v2025
      %v2056 = vadd.f32 %v1828, %v2030
      %v2057 = vadd.f32 %v1829, %v2035
      %v2058 = vadd.f32 %v1830, %v2040
      %v2059 = vld [vmem:[%s1602 + $0x2] sm:$0xff]
      %v2060 = vld [vmem:[%s1602 + $0xa] sm:$0xff]
      %v2061 = vld [vmem:[%s1602 + $0x1a] sm:$0xff]
      %v2062 = vld [vmem:[%s1602 + $0x22] sm:$0xff]
      %v2063 = vld [vmem:[%s1602 + $0x32] sm:$0xff]
      %v2064 = vld [vmem:[%s1602 + $0x3a] sm:$0xff]
      %v2065 = vld [vmem:[%s1602 + $0x4a] sm:$0xff]
      %v2066 = vld [vmem:[%s1602 + $0x52] sm:$0xff]
      %v2067 = vld [vmem:[%s1602 + $0x62] sm:$0xff]
      %v2068 = vld [vmem:[%s1602 + $0x6a] sm:$0xff]
      %v2069 = vld [vmem:[%s1602 + $0x7a] sm:$0xff]
      %v2070 = vld [vmem:[%s1602 + $0x82] sm:$0xff]
      %v2071 = vld [vmem:[%s1602 + $0x92] sm:$0xff]
      %v2072 = vld [vmem:[%s1602 + $0x9a] sm:$0xff]
      %v2073 = vld [vmem:[%s1602 + $0xaa] sm:$0xff]
      %v2074 = vld [vmem:[%s1602 + $0xb2] sm:$0xff]
      %v2076 = vsel %vm198, %v2059, 0
      %v2079 = vsel %vm198, %v2060, 0
      %v2082 = vsel %vm198, %v2061, 0
      %v2085 = vsel %vm198, %v2062, 0
      %v2088 = vsel %vm198, %v2063, 0
      %v2091 = vsel %vm198, %v2064, 0
      %v2094 = vsel %vm198, %v2065, 0
      %v2097 = vsel %vm198, %v2066, 0
      %v2100 = vsel %vm198, %v2067, 0
      %v2103 = vsel %vm198, %v2068, 0
      %v2106 = vsel %vm198, %v2069, 0
      %v2109 = vsel %vm198, %v2070, 0
      %v2112 = vsel %vm198, %v2071, 0
      %v2115 = vsel %vm198, %v2072, 0
      %v2118 = vsel %vm198, %v2073, 0
      %v2121 = vsel %vm198, %v2074, 0
      %v2124 = vsel %vm347, %v264, 0
      %2126 = vmatprep.subr.mxu0 0.0
      %2127 = vmatpush1.msra.mxu0 %v2124
      %2128 = vmatprep.subr.mxu0 0.0
      %2129 = vmatpush1.msra.mxu0 0.0
      %2130 = vmatprep.subr.mxu0 0.0
      %2131 = vmatpush1.msra.mxu0 0.0
      %2132 = vmatprep.subr.mxu0 0.0
      %2133 = vmatpush1.msra.mxu0 0.0
      %2134 = vmatprep.subr.mxu0 0.0
      %2135 = vmatpush1.msra.mxu0 0.0
      %2136 = vmatprep.subr.mxu0 0.0
      %2137 = vmatpush1.msra.mxu0 0.0
      %2138 = vmatprep.subr.mxu0 0.0
      %2139 = vmatpush1.msra.mxu0 0.0
      %2140 = vmatprep.subr.mxu0 0.0
      %2141 = vmatpush1.msra.mxu0 0.0
      %2142 = vmatprep.subr.mxu0 0.0
      %2143 = vmatpush1.msra.mxu0 0.0
      %2144 = vmatprep.subr.mxu0 0.0
      %2145 = vmatpush1.msra.mxu0 0.0
      %2146 = vmatprep.subr.mxu0 0.0
      %2147 = vmatpush1.msra.mxu0 0.0
      %2148 = vmatprep.subr.mxu0 0.0
      %2149 = vmatpush1.msra.mxu0 0.0
      %2150 = vmatprep.subr.mxu0 0.0
      %2151 = vmatpush1.msra.mxu0 0.0
      %2152 = vmatprep.subr.mxu0 0.0
      %2153 = vmatpush1.msra.mxu0 0.0
      %2154 = vmatprep.subr.mxu0 0.0
      %2155 = vmatpush1.msra.mxu0 0.0
      %2156 = vmatprep.subr.mxu0 0.0
      %2157 = vmatpush1.msra.mxu0 0.0
      %2158 = vmatprep.subr.mxu0 0.0
      %2159 = vmatpush1.msra.mxu0 0.0
      %2160 = vmatprep.subr.mxu0 0.0
      %2161 = vmatpush1.msra.mxu0 0.0
      %2162 = vmatprep.subr.mxu0 0.0
      %2163 = vmatpush1.msra.mxu0 0.0
      %2164 = vmatprep.subr.mxu0 0.0
      %2165 = vmatpush1.msra.mxu0 0.0
      %2166 = vmatprep.subr.mxu0 0.0
      %2167 = vmatpush1.msra.mxu0 0.0
      %2168 = vmatprep.subr.mxu0 0.0
      %2169 = vmatpush1.msra.mxu0 0.0
      %2170 = vmatprep.subr.mxu0 0.0
      %2171 = vmatpush1.msra.mxu0 0.0
      %2172 = vmatprep.subr.mxu0 0.0
      %2173 = vmatpush1.msra.mxu0 0.0
      %2174 = vmatprep.subr.mxu0 0.0
      %2175 = vmatpush1.msra.mxu0 0.0
      %2176 = vmatprep.subr.mxu0 0.0
      %2177 = vmatpush1.msra.mxu0 0.0
      %2178 = vmatprep.subr.mxu0 0.0
      %2179 = vmatpush1.msra.mxu0 0.0
      %2180 = vmatprep.subr.mxu0 0.0
      %2181 = vmatpush1.msra.mxu0 0.0
      %2182 = vmatprep.subr.mxu0 0.0
      %2183 = vmatpush1.msra.mxu0 0.0
      %2184 = vmatprep.subr.mxu0 0.0
      %2185 = vmatpush1.msra.mxu0 0.0
      %2186 = vmatprep.subr.mxu0 0.0
      %2187 = vmatpush1.msra.mxu0 0.0
      %2188 = vmatprep.subr.mxu0 0.0
      %2189 = vmatpush1.msra.mxu0 0.0
      %2190 = vmatprep.mubr.f32.mxu0 0.0
      %2191 = vmatmul.mubr.f32.gmra.mrb[0].mxu0 %v2076
      %v2192 = vpop.f32.mrb[0].mxu0
      %v2193 = vadd.f32 0.0, %v2192
      %v2194 = vpop.f32.mrb[0].mxu0
      %2195 = vmatprep.mubr.f32.mxu0 0.0
      %2196 = vmatmul.mubr.f32.gmra.mrb[0].mxu0 %v2079
      %v2197 = vpop.f32.mrb[0].mxu0
      %v2198 = vadd.f32 0.0, %v2197
      %v2199 = vpop.f32.mrb[0].mxu0
      %2200 = vmatprep.mubr.f32.mxu0 0.0
      %2201 = vmatmul.mubr.f32.gmra.mrb[0].mxu0 %v2082
      %v2202 = vpop.f32.mrb[0].mxu0
      %v2203 = vadd.f32 0.0, %v2202
      %v2204 = vpop.f32.mrb[0].mxu0
      %2205 = vmatprep.mubr.f32.mxu0 0.0
      %2206 = vmatmul.mubr.f32.gmra.mrb[0].mxu0 %v2085
      %v2207 = vpop.f32.mrb[0].mxu0
      %v2208 = vadd.f32 0.0, %v2207
      %v2209 = vpop.f32.mrb[0].mxu0
      %2210 = vmatprep.mubr.f32.mxu0 0.0
      %2211 = vmatmul.mubr.f32.gmra.mrb[0].mxu0 %v2088
      %v2212 = vpop.f32.mrb[0].mxu0
      %v2213 = vadd.f32 0.0, %v2212
      %v2214 = vpop.f32.mrb[0].mxu0
      %2215 = vmatprep.mubr.f32.mxu0 0.0
      %2216 = vmatmul.mubr.f32.gmra.mrb[0].mxu0 %v2091
      %v2217 = vpop.f32.mrb[0].mxu0
      %v2218 = vadd.f32 0.0, %v2217
      %v2219 = vpop.f32.mrb[0].mxu0
      %2220 = vmatprep.mubr.f32.mxu0 0.0
      %2221 = vmatmul.mubr.f32.gmra.mrb[0].mxu0 %v2094
      %v2222 = vpop.f32.mrb[0].mxu0
      %v2223 = vadd.f32 0.0, %v2222
      %v2224 = vpop.f32.mrb[0].mxu0
      %2225 = vmatprep.mubr.f32.mxu0 0.0
      %2226 = vmatmul.mubr.f32.gmra.mrb[0].mxu0 %v2097
      %v2227 = vpop.f32.mrb[0].mxu0
      %v2228 = vadd.f32 0.0, %v2227
      %v2229 = vpop.f32.mrb[0].mxu0
      %2230 = vmatprep.mubr.f32.mxu0 0.0
      %2231 = vmatmul.mubr.f32.gmra.mrb[0].mxu0 %v2100
      %v2232 = vpop.f32.mrb[0].mxu0
      %v2233 = vadd.f32 0.0, %v2232
      %v2234 = vpop.f32.mrb[0].mxu0
      %2235 = vmatprep.mubr.f32.mxu0 0.0
      %2236 = vmatmul.mubr.f32.gmra.mrb[0].mxu0 %v2103
      %v2237 = vpop.f32.mrb[0].mxu0
      %v2238 = vadd.f32 0.0, %v2237
      %v2239 = vpop.f32.mrb[0].mxu0
      %2240 = vmatprep.mubr.f32.mxu0 0.0
      %2241 = vmatmul.mubr.f32.gmra.mrb[0].mxu0 %v2106
      %v2242 = vpop.f32.mrb[0].mxu0
      %v2243 = vadd.f32 0.0, %v2242
      %v2244 = vpop.f32.mrb[0].mxu0
      %2245 = vmatprep.mubr.f32.mxu0 0.0
      %2246 = vmatmul.mubr.f32.gmra.mrb[0].mxu0 %v2109
      %v2247 = vpop.f32.mrb[0].mxu0
      %v2248 = vadd.f32 0.0, %v2247
      %v2249 = vpop.f32.mrb[0].mxu0
      %2250 = vmatprep.mubr.f32.mxu0 0.0
      %2251 = vmatmul.mubr.f32.gmra.mrb[0].mxu0 %v2112
      %v2252 = vpop.f32.mrb[0].mxu0
      %v2253 = vadd.f32 0.0, %v2252
      %v2254 = vpop.f32.mrb[0].mxu0
      %2255 = vmatprep.mubr.f32.mxu0 0.0
      %2256 = vmatmul.mubr.f32.gmra.mrb[0].mxu0 %v2115
      %v2257 = vpop.f32.mrb[0].mxu0
      %v2258 = vadd.f32 0.0, %v2257
      %v2259 = vpop.f32.mrb[0].mxu0
      %2260 = vmatprep.mubr.f32.mxu0 0.0
      %2261 = vmatmul.mubr.f32.gmra.mrb[0].mxu0 %v2118
      %v2262 = vpop.f32.mrb[0].mxu0
      %v2263 = vadd.f32 0.0, %v2262
      %v2264 = vpop.f32.mrb[0].mxu0
      %2265 = vmatprep.mubr.f32.mxu0 0.0
      %2266 = vmatmul.mubr.f32.gmra.mrb[0].mxu0 %v2121
      %v2267 = vpop.f32.mrb[0].mxu0
      %v2268 = vadd.f32 0.0, %v2267
      %v2269 = vpop.f32.mrb[0].mxu0
      %2270 = vdwg.mxu0
      %v2271 = vadd.f32 %v2043, %v2193
      %v2272 = vadd.f32 %v2044, %v2198
      %v2273 = vadd.f32 %v2045, %v2203
      %v2274 = vadd.f32 %v2046, %v2208
      %v2275 = vadd.f32 %v2047, %v2213
      %v2276 = vadd.f32 %v2048, %v2218
      %v2277 = vadd.f32 %v2049, %v2223
      %v2278 = vadd.f32 %v2050, %v2228
      %v2279 = vadd.f32 %v2051, %v2233
      %v2280 = vadd.f32 %v2052, %v2238
      %v2281 = vadd.f32 %v2053, %v2243
      %v2282 = vadd.f32 %v2054, %v2248
      %v2283 = vadd.f32 %v2055, %v2253
      %v2284 = vadd.f32 %v2056, %v2258
      %v2285 = vadd.f32 %v2057, %v2263
      %v2286 = vadd.f32 %v2058, %v2268
      %v2287 = vld [vmem:[%s2] sm:$0x1]
      %v2289 = vlaneseq
      %v2290 = vshrl.u32 %v2289, 7
      %v2291 = vsub.s32 0, %v2290
      %v2292 = vrot.slane %v2287, %v2291
      %v2294 = vmul.f32 %v2271, %v2292
      %v2295 = vmul.f32 %v2272, %v2292
      %v2296 = vmul.f32 %v2273, %v2292
      %v2297 = vmul.f32 %v2274, %v2292
      %v2298 = vmul.f32 %v2275, %v2292
      %v2299 = vmul.f32 %v2276, %v2292
      %v2300 = vmul.f32 %v2277, %v2292
      %v2301 = vmul.f32 %v2278, %v2292
      %v2302 = vmul.f32 %v2279, %v2292
      %v2303 = vmul.f32 %v2280, %v2292
      %v2304 = vmul.f32 %v2281, %v2292
      %v2305 = vmul.f32 %v2282, %v2292
      %v2306 = vmul.f32 %v2283, %v2292
      %v2307 = vmul.f32 %v2284, %v2292
      %v2308 = vmul.f32 %v2285, %v2292
      %v2309 = vmul.f32 %v2286, %v2292
      %v2310 = vld [vmem:[%s3] sm:$0x1]
      %v2312 = vlaneseq
      %v2313 = vshrl.u32 %v2312, 7
      %v2314 = vsub.s32 0, %v2313
      %v2315 = vrot.slane %v2310, %v2314
      %v2317 = vadd.f32 %v2294, %v2315
      %v2318 = vadd.f32 %v2295, %v2315
      %v2319 = vadd.f32 %v2296, %v2315
      %v2320 = vadd.f32 %v2297, %v2315
      %v2321 = vadd.f32 %v2298, %v2315
      %v2322 = vadd.f32 %v2299, %v2315
      %v2323 = vadd.f32 %v2300, %v2315
      %v2324 = vadd.f32 %v2301, %v2315
      %v2325 = vadd.f32 %v2302, %v2315
      %v2326 = vadd.f32 %v2303, %v2315
      %v2327 = vadd.f32 %v2304, %v2315
      %v2328 = vadd.f32 %v2305, %v2315
      %v2329 = vadd.f32 %v2306, %v2315
      %v2330 = vadd.f32 %v2307, %v2315
      %v2331 = vadd.f32 %v2308, %v2315
      %v2332 = vadd.f32 %v2309, %v2315
      %v2333 = vmax.f32 %v2317, 0.0
      %v2334 = vmax.f32 %v2318, 0.0
      %v2335 = vmax.f32 %v2319, 0.0
      %v2336 = vmax.f32 %v2320, 0.0
      %v2337 = vmax.f32 %v2321, 0.0
      %v2338 = vmax.f32 %v2322, 0.0
      %v2339 = vmax.f32 %v2323, 0.0
      %v2340 = vmax.f32 %v2324, 0.0
      %v2341 = vmax.f32 %v2325, 0.0
      %v2342 = vmax.f32 %v2326, 0.0
      %v2343 = vmax.f32 %v2327, 0.0
      %v2344 = vmax.f32 %v2328, 0.0
      %v2345 = vmax.f32 %v2329, 0.0
      %v2346 = vmax.f32 %v2330, 0.0
      %v2347 = vmax.f32 %v2331, 0.0
      %v2348 = vmax.f32 %v2332, 0.0
      %vm2349 = vcmask 15360
      %2350 = vst.msk [vmem:[%s197] sm:$0xff] %vm2349, %v2333
      %2351 = vst.msk [vmem:[%s197 + $0x8] sm:$0xff] %vm2349, %v2334
      %2352 = vst.msk [vmem:[%s197 + $0x10] sm:$0xff] %vm2349, %v2335
      %2353 = vst.msk [vmem:[%s197 + $0x18] sm:$0xff] %vm2349, %v2336
      %2354 = vst.msk [vmem:[%s197 + $0x20] sm:$0xff] %vm2349, %v2337
      %2355 = vst.msk [vmem:[%s197 + $0x28] sm:$0xff] %vm2349, %v2338
      %2356 = vst.msk [vmem:[%s197 + $0x30] sm:$0xff] %vm2349, %v2339
      %2357 = vst.msk [vmem:[%s197 + $0x38] sm:$0xff] %vm2349, %v2340
      %2358 = vst.msk [vmem:[%s197 + $0x40] sm:$0xff] %vm2349, %v2341
      %2359 = vst.msk [vmem:[%s197 + $0x48] sm:$0xff] %vm2349, %v2342
      %2360 = vst.msk [vmem:[%s197 + $0x50] sm:$0xff] %vm2349, %v2343
      %2361 = vst.msk [vmem:[%s197 + $0x58] sm:$0xff] %vm2349, %v2344
      %2362 = vst.msk [vmem:[%s197 + $0x60] sm:$0xff] %vm2349, %v2345
      %2363 = vst.msk [vmem:[%s197 + $0x68] sm:$0xff] %vm2349, %v2346
      %2364 = vst.msk [vmem:[%s197 + $0x70] sm:$0xff] %vm2349, %v2347
      %2365 = vst.msk [vmem:[%s197 + $0x78] sm:$0xff] %vm2349, %v2348
      %p2366 = scmp.lt.s32.totalorder %s15, 1
      %s2367 = scalar_select %p2366, %s15, 1
      %s2368 = smul.addr %s2367, 16
      %s2369 = smul.addr %s2368, 8
      %s2370 = scalar_lea.vmem %s4, %s2369
      // Predicated region
      $region37: #{tpu_custom_call.1} parent=35 // pred_check
        %p2371 = pneg %p122
      $region38: #{tpu_custom_call.1} parent=35 // pred_check_branch
        %2373 = sbr.rel (%p2371) target = $region40
      $region39: #{tpu_custom_call.1} parent=35 // pred_region
        _
      $region40: #{tpu_custom_call.1} parent=35 // pred_fallthru
        _
    $region36: #{tpu_custom_call.1} parent=5 // pred_fallthru
      _
    %p2374 = scmp.le.s32.totalorder 2, %s10
    // Predicated region
    $region41: #{tpu_custom_call.1} parent=5 // pred_check
      %p2375 = pneg %p2374
    $region42: #{tpu_custom_call.1} parent=5 // pred_check_branch
      %2377 = sbr.rel (%p2375) target = $region44
    $region43: #{tpu_custom_call.1} parent=5 // pred_region
      %s2378 = ssub.s32 %s10, 2
      // Predicated region
      $region45: #{tpu_custom_call.1} parent=43 // pred_check
        %p2379 = pneg %p128
      $region46: #{tpu_custom_call.1} parent=43 // pred_check_branch
        %2381 = sbr.rel (%p2379) target = $region48
      $region47: #{tpu_custom_call.1} parent=43 // pred_region
        %p2382 = scmp.lt.s32.totalorder %s16, 1
        %s2383 = scalar_select %p2382, %s16, 1
        %s2384 = smul.addr %s2383, 16
        %s2385 = smul.addr %s2384, 8
        %s2386 = scalar_lea.vmem %s4, %s2385
      $region48: #{tpu_custom_call.1} parent=43 // pred_fallthru
        _
    $region44: #{tpu_custom_call.1} parent=5 // pred_fallthru
      _
  $region6: #{tpu_custom_call.1} parent=0 // loop_footer
    %s14 = sadd.s32 1, %s10
  $region7: #{tpu_custom_call.1} parent=0 // loop_footer_branch
    %9 = sbr.rel target = $region3
  $region8: #{tpu_custom_call.1} parent=0 // loop_exit
    _

</llo_original>
